<compile_context>
chip_gen: v5e
topology: v5e:2x2
jax: 0.10.0
libtpu: 0.0.40
codegen_flags: <defaults>
</compile_context>

<pallas_src>
import functools
import math

import numpy as np
import jax
import jax.numpy as jnp
from jax.experimental import pallas as pl
from jax.experimental.pallas import tpu as pltpu


def _round_up(x, m):
    return (x + m - 1) // m * m


# ----------------------------------------------------------------------------- fused encoder kernel

def _encoder_kernel(x_ref, mc_ref, mr_ref,
                    wq_ref, bq_ref, wk_ref, bk_ref, wv_ref, bv_ref, wo_ref, bo_ref,
                    g1_ref, be1_ref, w1_ref, b1_ref, w2_ref, b2_ref, g2_ref, be2_ref,
                    out_ref, xs_ref, *,
                    n_layers, n_heads, kernel_size, hidden, ln_eps):
    l = pl.program_id(1)                   # layer index (inner, "arbitrary")
    T, Cp = xs_ref.shape                   # padded channel width (multiple of 128)
    C = hidden                             # true channel count (LayerNorm statistics use this)
    dk = C // n_heads
    pad = kernel_size // 2
    inv_c = jnp.float32(1.0 / C)

    # Load the residual stream into the carried VMEM scratch on this batch element's first layer.
    @pl.when(l == 0)
    def _():
        xs_ref[...] = x_ref[0]

    x = xs_ref[...]                        # (T, Cp) f32 residual stream
    mcol = mc_ref[0]                       # (T, 1)  0/1 sequence mask
    mrow = mr_ref[0]                       # (1, T)
    amask = mcol * mrow                    # (T, T)  attention mask, rebuilt in-kernel

    def layer_norm(h, gamma, beta):
        # One-pass stats: two lane reductions (sum, sum of squares) instead of three.
        # Padded lanes of h are zero, so dividing by the true C gives exact stats; gamma/beta
        # are zero in the pad, so padded lanes stay exactly zero.
        mu = jnp.sum(h, axis=-1, keepdims=True) * inv_c
        ms = jnp.sum(h * h, axis=-1, keepdims=True) * inv_c
        var = jnp.maximum(ms - mu * mu, 0.0)
        return (h - mu) * jax.lax.rsqrt(var + ln_eps) * gamma + beta

    def conv1d_same(h, w_ref_, b_ref_):
        # 'same'-padded Conv1d as ONE matmul against the tap-major flattened (k*Cin_p, Cout_p)
        # bf16 weight.  Channels are padded to 128, so the k concatenated views are lane-aligned.
        if kernel_size == 1:
            hcat = h
        else:
            zp = jnp.zeros((pad, h.shape[1]), jnp.float32)
            hp = jnp.concatenate([zp, h, zp], axis=0)                         # (T + 2*pad, Cin_p)
            hcat = jnp.concatenate(
                [hp[j:j + T, :] for j in range(kernel_size)], axis=1)         # (T, k*Cin_p)
        return jnp.dot(hcat.astype(jnp.bfloat16), w_ref_[0],
                       preferred_element_type=jnp.float32) + b_ref_[0]

    # ---------------- multi-head self-attention ----------------
    xb = x.astype(jnp.bfloat16)
    q = jnp.dot(xb, wq_ref[0], preferred_element_type=jnp.float32) + bq_ref[0]   # 1/sqrt(dk) folded into wq/bq
    k = jnp.dot(xb, wk_ref[0], preferred_element_type=jnp.float32) + bk_ref[0]
    v = jnp.dot(xb, wv_ref[0], preferred_element_type=jnp.float32) + bv_ref[0]
    wo = wo_ref[0]                                                                # (Cp, Cp) bf16

    y = None
    for h in range(n_heads):
        sl = slice(h * dk, (h + 1) * dk)
        qh = q[:, sl].astype(jnp.bfloat16)
        kh = k[:, sl].astype(jnp.bfloat16)
        vh = v[:, sl].astype(jnp.bfloat16)
        # scores[t, s] = <qh[t], kh[s]>  (dot_general avoids an explicit transpose)
        s = jax.lax.dot_general(qh, kh, (((1,), (1,)), ((), ())),
                                preferred_element_type=jnp.float32)              # (T, T) f32
        s = jnp.where(amask > 0.0, s, jnp.float32(-1e4))    # masked_fill(mask==0, -1e4)
        s = s - jnp.max(s, axis=-1, keepdims=True)           # stable softmax (math-invariant)
        p = jnp.exp(s)
        p = p * pl.reciprocal(jnp.sum(p, axis=-1, keepdims=True), approx=True)
        # TODO(synk): attention dropout is identity (eval mode).
        hv = jnp.dot(p.astype(jnp.bfloat16), vh, preferred_element_type=jnp.float32)      # (T, dk)
        ctr = jnp.dot(hv.astype(jnp.bfloat16), wo[sl, :], preferred_element_type=jnp.float32)
        y = ctr if y is None else y + ctr                    # fold heads into wo -> no concat
    y = y + bo_ref[0]

    x = layer_norm(x + y, g1_ref[0], be1_ref[0])

    # ---------------- FFN (conv -> relu -> conv), masked as in the reference ----------------
    h1 = conv1d_same(x * mcol, w1_ref, b1_ref)
    h1 = jnp.maximum(h1, 0.0)
    y = conv1d_same(h1 * mcol, w2_ref, b2_ref) * mcol
    x = layer_norm(x + y, g2_ref[0], be2_ref[0])

    xs_ref[...] = x                                           # carry residual stream to next layer

    @pl.when(l == n_layers - 1)
    def _():
        out_ref[0] = x * mcol                                 # apply_mask(x, x_mask)


# ----------------------------------------------------------------------------- wrapper

def encoder_forward(params, x, x_mask, cfg):
    """x: (B, C, T) NCW, x_mask: (B, T) 0/1 floats. Returns (B, C, T)."""
    B, C, T = x.shape
    assert C == cfg["hidden_dim"]
    assert cfg["kernel_size"] % 2 == 1, "only odd kernel_size matches Conv1d(padding=k//2)"
    L = cfg["n_layers"]
    Cp = params["wq"].shape[-1]            # padded channel width (multiple of 128)

    xc = jnp.transpose(x, (0, 2, 1)).astype(jnp.float32)       # (B, T, C) channels-last
    xc = jnp.pad(xc, ((0, 0), (0, 0), (0, Cp - C)))            # lane-pad channels
    mc = x_mask[:, :, None].astype(jnp.float32)                # (B, T, 1)
    mr = x_mask[:, None, :].astype(jnp.float32)                # (B, 1, T)   (no O(T^2) mask input)

    weight_order = ["wq", "bq", "wk", "bk", "wv", "bv", "wo", "bo",
                    "g1", "be1", "w1", "b1", "w2", "b2", "g2", "be2"]
    weights = [params[n] for n in weight_order]

    kernel = functools.partial(
        _encoder_kernel,
        n_layers=L,
        n_heads=cfg["n_heads"],
        kernel_size=cfg["kernel_size"],
        hidden=C,
        ln_eps=cfg.get("ln_eps", 1e-4),    # Glow-TTS LayerNorm default eps
    )

    def bspec(block):                      # per-batch blocks, revisited across the layer axis
        return pl.BlockSpec(block, lambda b, l: (b, 0, 0))

    def lspec(arr):                        # per-layer weight blocks, streamed along the layer axis
        return pl.BlockSpec((1,) + arr.shape[1:], lambda b, l: (l, 0, 0))

    out = pl.pallas_call(
        kernel,
        out_shape=jax.ShapeDtypeStruct((B, T, Cp), jnp.float32),
        grid=(B, L),
        in_specs=[bspec((1, T, Cp)), bspec((1, T, 1)), bspec((1, 1, T))]
                 + [lspec(w) for w in weights],
        out_specs=bspec((1, T, Cp)),
        scratch_shapes=[pltpu.VMEM((T, Cp), jnp.float32)],      # carried residual stream
        compiler_params=pltpu.CompilerParams(
            dimension_semantics=("parallel", "arbitrary")),
    )(xc, mc, mr, *weights)

    return jnp.transpose(out[:, :, :C], (0, 2, 1))              # drop pad, back to NCW


# ----------------------------------------------------------------------------- params

def init_encoder_params(key, cfg):
    L = cfg["n_layers"]
    C = cfg["hidden_dim"]
    F = cfg["filter_channels"]
    k = cfg["kernel_size"]
    H = cfg["n_heads"]
    assert C % H == 0
    Cp = _round_up(C, 128)
    Fp = _round_up(F, 128)
    qk_scale = 1.0 / math.sqrt(C // H)

    key, *ks = jax.random.split(key, 13)

    def dense(kk, shape, fan_in):
        return jax.random.normal(kk, shape, jnp.float32) / np.sqrt(fan_in)

    def pad_mat(w, rows, cols):
        return jnp.pad(w, [(0, 0)] * (w.ndim - 2)
                       + [(0, rows - w.shape[-2]), (0, cols - w.shape[-1])])

    # 1x1 conv projections stored as (Cin, Cout) matmul weights; 1/sqrt(dk) folded into wq/bq.
    wq = dense(ks[0], (L, C, C), C) * qk_scale
    bq = 0.01 * jax.random.normal(ks[1], (L, 1, C), jnp.float32) * qk_scale
    wk = dense(ks[2], (L, C, C), C)
    bk = 0.01 * jax.random.normal(ks[3], (L, 1, C), jnp.float32)
    wv = dense(ks[4], (L, C, C), C)
    bv = 0.01 * jax.random.normal(ks[5], (L, 1, C), jnp.float32)
    wo = dense(ks[6], (L, C, C), C)
    bo = 0.01 * jax.random.normal(ks[7], (L, 1, C), jnp.float32)

    # FFN convs, tap-major flattened to (k*Cin_p, Cout_p) so the k taps fuse into one matmul.
    w1 = dense(ks[8], (L, k, C, F), k * C)
    b1 = 0.01 * jax.random.normal(ks[9], (L, 1, F), jnp.float32)
    w2 = dense(ks[10], (L, k, F, C), k * F)
    b2 = 0.01 * jax.random.normal(ks[11], (L, 1, C), jnp.float32)
    w1p = pad_mat(w1, Cp, Fp).reshape(L, k * Cp, Fp)
    w2p = pad_mat(w2, Fp, Cp).reshape(L, k * Fp, Cp)

    return dict(
        wq=pad_mat(wq, Cp, Cp).astype(jnp.bfloat16), bq=pad_mat(bq, 1, Cp),
        wk=pad_mat(wk, Cp, Cp).astype(jnp.bfloat16), bk=pad_mat(bk, 1, Cp),
        wv=pad_mat(wv, Cp, Cp).astype(jnp.bfloat16), bv=pad_mat(bv, 1, Cp),
        wo=pad_mat(wo, Cp, Cp).astype(jnp.bfloat16), bo=pad_mat(bo, 1, Cp),
        # LayerNorm params: zero in the channel padding so padded lanes stay exactly zero.
        g1=pad_mat(jnp.ones((L, 1, C), jnp.float32), 1, Cp),
        be1=jnp.zeros((L, 1, Cp), jnp.float32),
        g2=pad_mat(jnp.ones((L, 1, C), jnp.float32), 1, Cp),
        be2=jnp.zeros((L, 1, Cp), jnp.float32),
        w1=w1p.astype(jnp.bfloat16), b1=pad_mat(b1, 1, Fp),
        w2=w2p.astype(jnp.bfloat16), b2=pad_mat(b2, 1, Cp),
    )


# ----------------------------------------------------------------------------- main

if __name__ == "__main__":
    cfg = dict(
        hidden_dim=32,
        filter_channels=64,
        n_heads=2,
        n_layers=2,
        kernel_size=3,
        p_dropout=0.0,
        window_size=None,    # TODO(synk): relative-position attention not implemented
        block_length=None,   # TODO(synk): block-local masking not implemented
    )
    B, T = 2, 16

    key = jax.random.PRNGKey(0)
    kx, kp = jax.random.split(key)
    x = jax.random.normal(kx, (B, cfg["hidden_dim"], T), jnp.float32)
    lengths = jnp.array([16, 12], jnp.int32)
    x_mask = (jnp.arange(T)[None, :] < lengths[:, None]).astype(jnp.float32)   # (B, T)

    params = init_encoder_params(kp, cfg)

    y = encoder_forward(params, x, x_mask, cfg)
    y = jax.block_until_ready(y)

    assert y.shape == (B, cfg["hidden_dim"], T), y.shape
    assert bool(jnp.all(jnp.isfinite(y)))
    # masked time-steps must be exactly zero (apply_mask semantics)
    assert bool(jnp.all(jnp.where(x_mask[:, None, :] == 0.0, y == 0.0, True)))
    print("KERNEL_OK")
</pallas_src>

<mosaic_0001>
module attributes {stable_mosaic.version = 11 : i64} {
  func.func @_encoder_kernel(%arg0: i32, %arg1: i32, %arg2: memref<1x16x128xf32, #tpu.memory_space<vmem>>, %arg3: memref<1x16x1xf32, #tpu.memory_space<vmem>>, %arg4: memref<1x1x16xf32, #tpu.memory_space<vmem>>, %arg5: memref<1x128x128xbf16, #tpu.memory_space<vmem>>, %arg6: memref<1x1x128xf32, #tpu.memory_space<vmem>>, %arg7: memref<1x128x128xbf16, #tpu.memory_space<vmem>>, %arg8: memref<1x1x128xf32, #tpu.memory_space<vmem>>, %arg9: memref<1x128x128xbf16, #tpu.memory_space<vmem>>, %arg10: memref<1x1x128xf32, #tpu.memory_space<vmem>>, %arg11: memref<1x128x128xbf16, #tpu.memory_space<vmem>>, %arg12: memref<1x1x128xf32, #tpu.memory_space<vmem>>, %arg13: memref<1x1x128xf32, #tpu.memory_space<vmem>>, %arg14: memref<1x1x128xf32, #tpu.memory_space<vmem>>, %arg15: memref<1x384x128xbf16, #tpu.memory_space<vmem>>, %arg16: memref<1x1x128xf32, #tpu.memory_space<vmem>>, %arg17: memref<1x384x128xbf16, #tpu.memory_space<vmem>>, %arg18: memref<1x1x128xf32, #tpu.memory_space<vmem>>, %arg19: memref<1x1x128xf32, #tpu.memory_space<vmem>>, %arg20: memref<1x1x128xf32, #tpu.memory_space<vmem>>, %arg21: memref<1x16x128xf32, #tpu.memory_space<vmem>>, %arg22: memref<16x128xf32, #tpu.memory_space<vmem>>) attributes {dimension_semantics = [#tpu.dimension_semantics<parallel>, #tpu.dimension_semantics<arbitrary>], iteration_bounds = array<i64: 2, 2>, scalar_prefetch = 0 : i64, scratch_operands = 1 : i64, tpu.core_type = #tpu.core_type<tc>, window_params = [{transform_indices = @transform_0, window_bounds = array<i64: 1, 16, 128>}, {transform_indices = @transform_1, window_bounds = array<i64: 1, 16, 1>}, {transform_indices = @transform_2, window_bounds = array<i64: 1, 1, 16>}, {transform_indices = @transform_3, window_bounds = array<i64: 1, 128, 128>}, {transform_indices = @transform_4, window_bounds = array<i64: 1, 1, 128>}, {transform_indices = @transform_5, window_bounds = array<i64: 1, 128, 128>}, {transform_indices = @transform_6, window_bounds = array<i64: 1, 1, 128>}, {transform_indices = @transform_7, window_bounds = array<i64: 1, 128, 128>}, {transform_indices = @transform_8, window_bounds = array<i64: 1, 1, 128>}, {transform_indices = @transform_9, window_bounds = array<i64: 1, 128, 128>}, {transform_indices = @transform_10, window_bounds = array<i64: 1, 1, 128>}, {transform_indices = @transform_11, window_bounds = array<i64: 1, 1, 128>}, {transform_indices = @transform_12, window_bounds = array<i64: 1, 1, 128>}, {transform_indices = @transform_13, window_bounds = array<i64: 1, 384, 128>}, {transform_indices = @transform_14, window_bounds = array<i64: 1, 1, 128>}, {transform_indices = @transform_15, window_bounds = array<i64: 1, 384, 128>}, {transform_indices = @transform_16, window_bounds = array<i64: 1, 1, 128>}, {transform_indices = @transform_17, window_bounds = array<i64: 1, 1, 128>}, {transform_indices = @transform_18, window_bounds = array<i64: 1, 1, 128>}, {transform_indices = @transform_19, window_bounds = array<i64: 1, 16, 128>}]} {
    %c0_i32 = arith.constant 0 : i32
    %0 = arith.cmpi eq, %arg1, %c0_i32 : i32
    %1 = arith.extui %0 : i1 to i32
    %c0_i32_0 = arith.constant 0 : i32
    %2 = arith.cmpi ne, %1, %c0_i32_0 : i32
    scf.if %2 {
      %c0_92 = arith.constant 0 : index
      %c0_93 = arith.constant 0 : index
      %c0_94 = arith.constant 0 : index
      %190 = vector.load %arg2[%c0_92, %c0_93, %c0_94] : memref<1x16x128xf32, #tpu.memory_space<vmem>>, vector<1x16x128xf32>
      %191 = vector.shape_cast %190 : vector<1x16x128xf32> to vector<16x128xf32>
      %c0_95 = arith.constant 0 : index
      %c0_96 = arith.constant 0 : index
      %192 = vector.load %arg22[%c0_95, %c0_96] : memref<16x128xf32, #tpu.memory_space<vmem>>, vector<16x128xf32>
      tpu.vector_store %arg22[%c0_95, %c0_96], %191 {strides = array<i32>} : memref<16x128xf32, #tpu.memory_space<vmem>>, vector<16x128xf32>,
    } else {
    }
    %c0 = arith.constant 0 : index
    %c0_1 = arith.constant 0 : index
    %3 = vector.load %arg22[%c0, %c0_1] : memref<16x128xf32, #tpu.memory_space<vmem>>, vector<16x128xf32>
    %c0_2 = arith.constant 0 : index
    %c0_3 = arith.constant 0 : index
    %c0_4 = arith.constant 0 : index
    %4 = vector.load %arg3[%c0_2, %c0_3, %c0_4] : memref<1x16x1xf32, #tpu.memory_space<vmem>>, vector<1x16x1xf32>
    %5 = vector.shape_cast %4 : vector<1x16x1xf32> to vector<16x1xf32>
    %c0_5 = arith.constant 0 : index
    %c0_6 = arith.constant 0 : index
    %c0_7 = arith.constant 0 : index
    %6 = vector.load %arg4[%c0_5, %c0_6, %c0_7] : memref<1x1x16xf32, #tpu.memory_space<vmem>>, vector<1x1x16xf32>
    %7 = vector.shape_cast %6 : vector<1x1x16xf32> to vector<1x16xf32>
    %8 = vector.broadcast %5 : vector<16x1xf32> to vector<16x16xf32>
    %9 = vector.broadcast %7 : vector<1x16xf32> to vector<16x16xf32>
    %10 = arith.mulf %8, %9 : vector<16x16xf32>
    %11 = arith.truncf %3 : vector<16x128xf32> to vector<16x128xbf16>
    %c0_8 = arith.constant 0 : index
    %c0_9 = arith.constant 0 : index
    %c0_10 = arith.constant 0 : index
    %12 = vector.load %arg5[%c0_8, %c0_9, %c0_10] : memref<1x128x128xbf16, #tpu.memory_space<vmem>>, vector<1x128x128xbf16>
    %13 = vector.shape_cast %12 : vector<1x128x128xbf16> to vector<128x128xbf16>
    %cst = arith.constant dense<0.000000e+00> : vector<16x128xf32>
    %14 = tpu.matmul %11, %13, %cst {dimension_numbers = #tpu.dot_dimension_numbers<[1], [0], [0], [1], [0, 0, 1, 1], [], []>} : vector<16x128xbf16>, vector<128x128xbf16>, vector<16x128xf32> -> vector<16x128xf32>
    %c0_11 = arith.constant 0 : index
    %c0_12 = arith.constant 0 : index
    %c0_13 = arith.constant 0 : index
    %15 = vector.load %arg6[%c0_11, %c0_12, %c0_13] : memref<1x1x128xf32, #tpu.memory_space<vmem>>, vector<1x1x128xf32>
    %16 = vector.shape_cast %15 : vector<1x1x128xf32> to vector<1x128xf32>
    %17 = vector.broadcast %16 : vector<1x128xf32> to vector<16x128xf32>
    %18 = arith.addf %14, %17 : vector<16x128xf32>
    %c0_14 = arith.constant 0 : index
    %c0_15 = arith.constant 0 : index
    %c0_16 = arith.constant 0 : index
    %19 = vector.load %arg7[%c0_14, %c0_15, %c0_16] : memref<1x128x128xbf16, #tpu.memory_space<vmem>>, vector<1x128x128xbf16>
    %20 = vector.shape_cast %19 : vector<1x128x128xbf16> to vector<128x128xbf16>
    %cst_17 = arith.constant dense<0.000000e+00> : vector<16x128xf32>
    %21 = tpu.matmul %11, %20, %cst_17 {dimension_numbers = #tpu.dot_dimension_numbers<[1], [0], [0], [1], [0, 0, 1, 1], [], []>} : vector<16x128xbf16>, vector<128x128xbf16>, vector<16x128xf32> -> vector<16x128xf32>
    %c0_18 = arith.constant 0 : index
    %c0_19 = arith.constant 0 : index
    %c0_20 = arith.constant 0 : index
    %22 = vector.load %arg8[%c0_18, %c0_19, %c0_20] : memref<1x1x128xf32, #tpu.memory_space<vmem>>, vector<1x1x128xf32>
    %23 = vector.shape_cast %22 : vector<1x1x128xf32> to vector<1x128xf32>
    %24 = vector.broadcast %23 : vector<1x128xf32> to vector<16x128xf32>
    %25 = arith.addf %21, %24 : vector<16x128xf32>
    %c0_21 = arith.constant 0 : index
    %c0_22 = arith.constant 0 : index
    %c0_23 = arith.constant 0 : index
    %26 = vector.load %arg9[%c0_21, %c0_22, %c0_23] : memref<1x128x128xbf16, #tpu.memory_space<vmem>>, vector<1x128x128xbf16>
    %27 = vector.shape_cast %26 : vector<1x128x128xbf16> to vector<128x128xbf16>
    %cst_24 = arith.constant dense<0.000000e+00> : vector<16x128xf32>
    %28 = tpu.matmul %11, %27, %cst_24 {dimension_numbers = #tpu.dot_dimension_numbers<[1], [0], [0], [1], [0, 0, 1, 1], [], []>} : vector<16x128xbf16>, vector<128x128xbf16>, vector<16x128xf32> -> vector<16x128xf32>
    %c0_25 = arith.constant 0 : index
    %c0_26 = arith.constant 0 : index
    %c0_27 = arith.constant 0 : index
    %29 = vector.load %arg10[%c0_25, %c0_26, %c0_27] : memref<1x1x128xf32, #tpu.memory_space<vmem>>, vector<1x1x128xf32>
    %30 = vector.shape_cast %29 : vector<1x1x128xf32> to vector<1x128xf32>
    %31 = vector.broadcast %30 : vector<1x128xf32> to vector<16x128xf32>
    %32 = arith.addf %28, %31 : vector<16x128xf32>
    %c0_28 = arith.constant 0 : index
    %c0_29 = arith.constant 0 : index
    %c0_30 = arith.constant 0 : index
    %33 = vector.load %arg11[%c0_28, %c0_29, %c0_30] : memref<1x128x128xbf16, #tpu.memory_space<vmem>>, vector<1x128x128xbf16>
    %34 = vector.shape_cast %33 : vector<1x128x128xbf16> to vector<128x128xbf16>
    %35 = vector.extract_strided_slice %18 {offsets = [0, 0], sizes = [16, 16], strides = [1, 1]} : vector<16x128xf32> to vector<16x16xf32>
    %36 = arith.truncf %35 : vector<16x16xf32> to vector<16x16xbf16>
    %37 = vector.extract_strided_slice %25 {offsets = [0, 0], sizes = [16, 16], strides = [1, 1]} : vector<16x128xf32> to vector<16x16xf32>
    %38 = arith.truncf %37 : vector<16x16xf32> to vector<16x16xbf16>
    %39 = vector.extract_strided_slice %32 {offsets = [0, 0], sizes = [16, 16], strides = [1, 1]} : vector<16x128xf32> to vector<16x16xf32>
    %40 = arith.truncf %39 : vector<16x16xf32> to vector<16x16xbf16>
    %cst_31 = arith.constant dense<0.000000e+00> : vector<16x16xf32>
    %41 = tpu.matmul %36, %38, %cst_31 {dimension_numbers = #tpu.dot_dimension_numbers<[1], [1], [0], [0], [0, 0, 1, 0], [], []>} : vector<16x16xbf16>, vector<16x16xbf16>, vector<16x16xf32> -> vector<16x16xf32>
    %cst_32 = arith.constant 0.000000e+00 : f32
    %42 = vector.broadcast %cst_32 : f32 to vector<16x16xf32>
    %43 = arith.cmpf ogt, %10, %42 : vector<16x16xf32>
    %cst_33 = arith.constant -1.000000e+04 : f32
    %44 = vector.broadcast %cst_33 : f32 to vector<16x16xf32>
    %45 = arith.select %43, %41, %44 : vector<16x16xi1>, vector<16x16xf32>
    %cst_34 = arith.constant dense<0xFF800000> : vector<16xf32>
    %46 = vector.multi_reduction <maximumf>, %45, %cst_34 [1] : vector<16x16xf32> to vector<16xf32>
    %47 = vector.shape_cast %46 : vector<16xf32> to vector<16x1xf32>
    %48 = vector.broadcast %47 : vector<16x1xf32> to vector<16x16xf32>
    %49 = arith.subf %45, %48 : vector<16x16xf32>
    %50 = math.exp %49 : vector<16x16xf32>
    %cst_35 = arith.constant dense<0.000000e+00> : vector<16xf32>
    %51 = vector.multi_reduction <add>, %50, %cst_35 [1] : vector<16x16xf32> to vector<16xf32>
    %52 = vector.shape_cast %51 : vector<16xf32> to vector<16x1xf32>
    %53 = tpu.reciprocal %52 {approx = true} : vector<16x1xf32> -> vector<16x1xf32>
    %54 = vector.broadcast %53 : vector<16x1xf32> to vector<16x16xf32>
    %55 = arith.mulf %50, %54 : vector<16x16xf32>
    %56 = arith.truncf %55 : vector<16x16xf32> to vector<16x16xbf16>
    %cst_36 = arith.constant dense<0.000000e+00> : vector<16x16xf32>
    %57 = tpu.matmul %56, %40, %cst_36 {dimension_numbers = #tpu.dot_dimension_numbers<[1], [0], [0], [1], [0, 0, 1, 1], [], []>} : vector<16x16xbf16>, vector<16x16xbf16>, vector<16x16xf32> -> vector<16x16xf32>
    %58 = arith.truncf %57 : vector<16x16xf32> to vector<16x16xbf16>
    %59 = vector.extract_strided_slice %34 {offsets = [0, 0], sizes = [16, 128], strides = [1, 1]} : vector<128x128xbf16> to vector<16x128xbf16>
    %cst_37 = arith.constant dense<0.000000e+00> : vector<16x128xf32>
    %60 = tpu.matmul %58, %59, %cst_37 {dimension_numbers = #tpu.dot_dimension_numbers<[1], [0], [0], [1], [0, 0, 1, 1], [], []>} : vector<16x16xbf16>, vector<16x128xbf16>, vector<16x128xf32> -> vector<16x128xf32>
    %61 = vector.extract_strided_slice %18 {offsets = [0, 16], sizes = [16, 16], strides = [1, 1]} : vector<16x128xf32> to vector<16x16xf32>
    %62 = arith.truncf %61 : vector<16x16xf32> to vector<16x16xbf16>
    %63 = vector.extract_strided_slice %25 {offsets = [0, 16], sizes = [16, 16], strides = [1, 1]} : vector<16x128xf32> to vector<16x16xf32>
    %64 = arith.truncf %63 : vector<16x16xf32> to vector<16x16xbf16>
    %65 = vector.extract_strided_slice %32 {offsets = [0, 16], sizes = [16, 16], strides = [1, 1]} : vector<16x128xf32> to vector<16x16xf32>
    %66 = arith.truncf %65 : vector<16x16xf32> to vector<16x16xbf16>
    %cst_38 = arith.constant dense<0.000000e+00> : vector<16x16xf32>
    %67 = tpu.matmul %62, %64, %cst_38 {dimension_numbers = #tpu.dot_dimension_numbers<[1], [1], [0], [0], [0, 0, 1, 0], [], []>} : vector<16x16xbf16>, vector<16x16xbf16>, vector<16x16xf32> -> vector<16x16xf32>
    %cst_39 = arith.constant 0.000000e+00 : f32
    %68 = vector.broadcast %cst_39 : f32 to vector<16x16xf32>
    %69 = arith.cmpf ogt, %10, %68 : vector<16x16xf32>
    %cst_40 = arith.constant -1.000000e+04 : f32
    %70 = vector.broadcast %cst_40 : f32 to vector<16x16xf32>
    %71 = arith.select %69, %67, %70 : vector<16x16xi1>, vector<16x16xf32>
    %cst_41 = arith.constant dense<0xFF800000> : vector<16xf32>
    %72 = vector.multi_reduction <maximumf>, %71, %cst_41 [1] : vector<16x16xf32> to vector<16xf32>
    %73 = vector.shape_cast %72 : vector<16xf32> to vector<16x1xf32>
    %74 = vector.broadcast %73 : vector<16x1xf32> to vector<16x16xf32>
    %75 = arith.subf %71, %74 : vector<16x16xf32>
    %76 = math.exp %75 : vector<16x16xf32>
    %cst_42 = arith.constant dense<0.000000e+00> : vector<16xf32>
    %77 = vector.multi_reduction <add>, %76, %cst_42 [1] : vector<16x16xf32> to vector<16xf32>
    %78 = vector.shape_cast %77 : vector<16xf32> to vector<16x1xf32>
    %79 = tpu.reciprocal %78 {approx = true} : vector<16x1xf32> -> vector<16x1xf32>
    %80 = vector.broadcast %79 : vector<16x1xf32> to vector<16x16xf32>
    %81 = arith.mulf %76, %80 : vector<16x16xf32>
    %82 = arith.truncf %81 : vector<16x16xf32> to vector<16x16xbf16>
    %cst_43 = arith.constant dense<0.000000e+00> : vector<16x16xf32>
    %83 = tpu.matmul %82, %66, %cst_43 {dimension_numbers = #tpu.dot_dimension_numbers<[1], [0], [0], [1], [0, 0, 1, 1], [], []>} : vector<16x16xbf16>, vector<16x16xbf16>, vector<16x16xf32> -> vector<16x16xf32>
    %84 = arith.truncf %83 : vector<16x16xf32> to vector<16x16xbf16>
    %85 = vector.extract_strided_slice %34 {offsets = [16, 0], sizes = [16, 128], strides = [1, 1]} : vector<128x128xbf16> to vector<16x128xbf16>
    %cst_44 = arith.constant dense<0.000000e+00> : vector<16x128xf32>
    %86 = tpu.matmul %84, %85, %cst_44 {dimension_numbers = #tpu.dot_dimension_numbers<[1], [0], [0], [1], [0, 0, 1, 1], [], []>} : vector<16x16xbf16>, vector<16x128xbf16>, vector<16x128xf32> -> vector<16x128xf32>
    %87 = arith.addf %60, %86 : vector<16x128xf32>
    %c0_45 = arith.constant 0 : index
    %c0_46 = arith.constant 0 : index
    %c0_47 = arith.constant 0 : index
    %88 = vector.load %arg12[%c0_45, %c0_46, %c0_47] : memref<1x1x128xf32, #tpu.memory_space<vmem>>, vector<1x1x128xf32>
    %89 = vector.shape_cast %88 : vector<1x1x128xf32> to vector<1x128xf32>
    %90 = vector.broadcast %89 : vector<1x128xf32> to vector<16x128xf32>
    %91 = arith.addf %87, %90 : vector<16x128xf32>
    %92 = arith.addf %3, %91 : vector<16x128xf32>
    %c0_48 = arith.constant 0 : index
    %c0_49 = arith.constant 0 : index
    %c0_50 = arith.constant 0 : index
    %93 = vector.load %arg13[%c0_48, %c0_49, %c0_50] : memref<1x1x128xf32, #tpu.memory_space<vmem>>, vector<1x1x128xf32>
    %94 = vector.shape_cast %93 : vector<1x1x128xf32> to vector<1x128xf32>
    %c0_51 = arith.constant 0 : index
    %c0_52 = arith.constant 0 : index
    %c0_53 = arith.constant 0 : index
    %95 = vector.load %arg14[%c0_51, %c0_52, %c0_53] : memref<1x1x128xf32, #tpu.memory_space<vmem>>, vector<1x1x128xf32>
    %96 = vector.shape_cast %95 : vector<1x1x128xf32> to vector<1x128xf32>
    %cst_54 = arith.constant dense<0.000000e+00> : vector<16xf32>
    %97 = vector.multi_reduction <add>, %92, %cst_54 [1] : vector<16x128xf32> to vector<16xf32>
    %98 = vector.shape_cast %97 : vector<16xf32> to vector<16x1xf32>
    %cst_55 = arith.constant 3.125000e-02 : f32
    %99 = vector.broadcast %cst_55 : f32 to vector<16x1xf32>
    %100 = arith.mulf %98, %99 : vector<16x1xf32>
    %101 = arith.mulf %92, %92 : vector<16x128xf32>
    %cst_56 = arith.constant dense<0.000000e+00> : vector<16xf32>
    %102 = vector.multi_reduction <add>, %101, %cst_56 [1] : vector<16x128xf32> to vector<16xf32>
    %103 = vector.shape_cast %102 : vector<16xf32> to vector<16x1xf32>
    %cst_57 = arith.constant 3.125000e-02 : f32
    %104 = vector.broadcast %cst_57 : f32 to vector<16x1xf32>
    %105 = arith.mulf %103, %104 : vector<16x1xf32>
    %106 = arith.mulf %100, %100 : vector<16x1xf32>
    %107 = arith.subf %105, %106 : vector<16x1xf32>
    %cst_58 = arith.constant 0.000000e+00 : f32
    %108 = vector.broadcast %cst_58 : f32 to vector<16x1xf32>
    %109 = arith.maximumf %107, %108 : vector<16x1xf32>
    %110 = vector.broadcast %100 : vector<16x1xf32> to vector<16x128xf32>
    %111 = arith.subf %92, %110 : vector<16x128xf32>
    %cst_59 = arith.constant 9.99999974E-5 : f32
    %112 = vector.broadcast %cst_59 : f32 to vector<16x1xf32>
    %113 = arith.addf %109, %112 : vector<16x1xf32>
    %114 = math.rsqrt %113 : vector<16x1xf32>
    %115 = vector.broadcast %114 : vector<16x1xf32> to vector<16x128xf32>
    %116 = arith.mulf %111, %115 : vector<16x128xf32>
    %117 = vector.broadcast %94 : vector<1x128xf32> to vector<16x128xf32>
    %118 = arith.mulf %116, %117 : vector<16x128xf32>
    %119 = vector.broadcast %96 : vector<1x128xf32> to vector<16x128xf32>
    %120 = arith.addf %118, %119 : vector<16x128xf32>
    %121 = vector.broadcast %5 : vector<16x1xf32> to vector<16x128xf32>
    %122 = arith.mulf %120, %121 : vector<16x128xf32>
    %cst_60 = arith.constant 0.000000e+00 : f32
    %123 = vector.broadcast %cst_60 : f32 to vector<1x128xf32>
    %124 = tpu.concatenate %123, %122, %123 in 0 : vector<1x128xf32>, vector<16x128xf32>, vector<1x128xf32> -> vector<18x128xf32>
    %125 = vector.extract_strided_slice %124 {offsets = [0, 0], sizes = [16, 128], strides = [1, 1]} : vector<18x128xf32> to vector<16x128xf32>
    %126 = vector.extract_strided_slice %124 {offsets = [1, 0], sizes = [16, 128], strides = [1, 1]} : vector<18x128xf32> to vector<16x128xf32>
    %127 = vector.extract_strided_slice %124 {offsets = [2, 0], sizes = [16, 128], strides = [1, 1]} : vector<18x128xf32> to vector<16x128xf32>
    %128 = tpu.concatenate %125, %126, %127 in 1 : vector<16x128xf32>, vector<16x128xf32>, vector<16x128xf32> -> vector<16x384xf32>
    %129 = arith.truncf %128 : vector<16x384xf32> to vector<16x384xbf16>
    %c0_61 = arith.constant 0 : index
    %c0_62 = arith.constant 0 : index
    %c0_63 = arith.constant 0 : index
    %130 = vector.load %arg15[%c0_61, %c0_62, %c0_63] : memref<1x384x128xbf16, #tpu.memory_space<vmem>>, vector<1x384x128xbf16>
    %131 = vector.shape_cast %130 : vector<1x384x128xbf16> to vector<384x128xbf16>
    %cst_64 = arith.constant dense<0.000000e+00> : vector<16x128xf32>
    %132 = tpu.matmul %129, %131, %cst_64 {dimension_numbers = #tpu.dot_dimension_numbers<[1], [0], [0], [1], [0, 0, 1, 1], [], []>} : vector<16x384xbf16>, vector<384x128xbf16>, vector<16x128xf32> -> vector<16x128xf32>
    %c0_65 = arith.constant 0 : index
    %c0_66 = arith.constant 0 : index
    %c0_67 = arith.constant 0 : index
    %133 = vector.load %arg16[%c0_65, %c0_66, %c0_67] : memref<1x1x128xf32, #tpu.memory_space<vmem>>, vector<1x1x128xf32>
    %134 = vector.shape_cast %133 : vector<1x1x128xf32> to vector<1x128xf32>
    %135 = vector.broadcast %134 : vector<1x128xf32> to vector<16x128xf32>
    %136 = arith.addf %132, %135 : vector<16x128xf32>
    %cst_68 = arith.constant 0.000000e+00 : f32
    %137 = vector.broadcast %cst_68 : f32 to vector<16x128xf32>
    %138 = arith.maximumf %136, %137 : vector<16x128xf32>
    %139 = vector.broadcast %5 : vector<16x1xf32> to vector<16x128xf32>
    %140 = arith.mulf %138, %139 : vector<16x128xf32>
    %cst_69 = arith.constant 0.000000e+00 : f32
    %141 = vector.broadcast %cst_69 : f32 to vector<1x128xf32>
    %142 = tpu.concatenate %141, %140, %141 in 0 : vector<1x128xf32>, vector<16x128xf32>, vector<1x128xf32> -> vector<18x128xf32>
    %143 = vector.extract_strided_slice %142 {offsets = [0, 0], sizes = [16, 128], strides = [1, 1]} : vector<18x128xf32> to vector<16x128xf32>
    %144 = vector.extract_strided_slice %142 {offsets = [1, 0], sizes = [16, 128], strides = [1, 1]} : vector<18x128xf32> to vector<16x128xf32>
    %145 = vector.extract_strided_slice %142 {offsets = [2, 0], sizes = [16, 128], strides = [1, 1]} : vector<18x128xf32> to vector<16x128xf32>
    %146 = tpu.concatenate %143, %144, %145 in 1 : vector<16x128xf32>, vector<16x128xf32>, vector<16x128xf32> -> vector<16x384xf32>
    %147 = arith.truncf %146 : vector<16x384xf32> to vector<16x384xbf16>
    %c0_70 = arith.constant 0 : index
    %c0_71 = arith.constant 0 : index
    %c0_72 = arith.constant 0 : index
    %148 = vector.load %arg17[%c0_70, %c0_71, %c0_72] : memref<1x384x128xbf16, #tpu.memory_space<vmem>>, vector<1x384x128xbf16>
    %149 = vector.shape_cast %148 : vector<1x384x128xbf16> to vector<384x128xbf16>
    %cst_73 = arith.constant dense<0.000000e+00> : vector<16x128xf32>
    %150 = tpu.matmul %147, %149, %cst_73 {dimension_numbers = #tpu.dot_dimension_numbers<[1], [0], [0], [1], [0, 0, 1, 1], [], []>} : vector<16x384xbf16>, vector<384x128xbf16>, vector<16x128xf32> -> vector<16x128xf32>
    %c0_74 = arith.constant 0 : index
    %c0_75 = arith.constant 0 : index
    %c0_76 = arith.constant 0 : index
    %151 = vector.load %arg18[%c0_74, %c0_75, %c0_76] : memref<1x1x128xf32, #tpu.memory_space<vmem>>, vector<1x1x128xf32>
    %152 = vector.shape_cast %151 : vector<1x1x128xf32> to vector<1x128xf32>
    %153 = vector.broadcast %152 : vector<1x128xf32> to vector<16x128xf32>
    %154 = arith.addf %150, %153 : vector<16x128xf32>
    %155 = vector.broadcast %5 : vector<16x1xf32> to vector<16x128xf32>
    %156 = arith.mulf %154, %155 : vector<16x128xf32>
    %157 = arith.addf %120, %156 : vector<16x128xf32>
    %c0_77 = arith.constant 0 : index
    %c0_78 = arith.constant 0 : index
    %c0_79 = arith.constant 0 : index
    %158 = vector.load %arg19[%c0_77, %c0_78, %c0_79] : memref<1x1x128xf32, #tpu.memory_space<vmem>>, vector<1x1x128xf32>
    %159 = vector.shape_cast %158 : vector<1x1x128xf32> to vector<1x128xf32>
    %c0_80 = arith.constant 0 : index
    %c0_81 = arith.constant 0 : index
    %c0_82 = arith.constant 0 : index
    %160 = vector.load %arg20[%c0_80, %c0_81, %c0_82] : memref<1x1x128xf32, #tpu.memory_space<vmem>>, vector<1x1x128xf32>
    %161 = vector.shape_cast %160 : vector<1x1x128xf32> to vector<1x128xf32>
    %cst_83 = arith.constant dense<0.000000e+00> : vector<16xf32>
    %162 = vector.multi_reduction <add>, %157, %cst_83 [1] : vector<16x128xf32> to vector<16xf32>
    %163 = vector.shape_cast %162 : vector<16xf32> to vector<16x1xf32>
    %cst_84 = arith.constant 3.125000e-02 : f32
    %164 = vector.broadcast %cst_84 : f32 to vector<16x1xf32>
    %165 = arith.mulf %163, %164 : vector<16x1xf32>
    %166 = arith.mulf %157, %157 : vector<16x128xf32>
    %cst_85 = arith.constant dense<0.000000e+00> : vector<16xf32>
    %167 = vector.multi_reduction <add>, %166, %cst_85 [1] : vector<16x128xf32> to vector<16xf32>
    %168 = vector.shape_cast %167 : vector<16xf32> to vector<16x1xf32>
    %cst_86 = arith.constant 3.125000e-02 : f32
    %169 = vector.broadcast %cst_86 : f32 to vector<16x1xf32>
    %170 = arith.mulf %168, %169 : vector<16x1xf32>
    %171 = arith.mulf %165, %165 : vector<16x1xf32>
    %172 = arith.subf %170, %171 : vector<16x1xf32>
    %cst_87 = arith.constant 0.000000e+00 : f32
    %173 = vector.broadcast %cst_87 : f32 to vector<16x1xf32>
    %174 = arith.maximumf %172, %173 : vector<16x1xf32>
    %175 = vector.broadcast %165 : vector<16x1xf32> to vector<16x128xf32>
    %176 = arith.subf %157, %175 : vector<16x128xf32>
    %cst_88 = arith.constant 9.99999974E-5 : f32
    %177 = vector.broadcast %cst_88 : f32 to vector<16x1xf32>
    %178 = arith.addf %174, %177 : vector<16x1xf32>
    %179 = math.rsqrt %178 : vector<16x1xf32>
    %180 = vector.broadcast %179 : vector<16x1xf32> to vector<16x128xf32>
    %181 = arith.mulf %176, %180 : vector<16x128xf32>
    %182 = vector.broadcast %159 : vector<1x128xf32> to vector<16x128xf32>
    %183 = arith.mulf %181, %182 : vector<16x128xf32>
    %184 = vector.broadcast %161 : vector<1x128xf32> to vector<16x128xf32>
    %185 = arith.addf %183, %184 : vector<16x128xf32>
    %c0_89 = arith.constant 0 : index
    %c0_90 = arith.constant 0 : index
    %186 = vector.load %arg22[%c0_89, %c0_90] : memref<16x128xf32, #tpu.memory_space<vmem>>, vector<16x128xf32>
    tpu.vector_store %arg22[%c0_89, %c0_90], %185 {strides = array<i32>} : memref<16x128xf32, #tpu.memory_space<vmem>>, vector<16x128xf32>,
    %c1_i32 = arith.constant 1 : i32
    %187 = arith.cmpi eq, %arg1, %c1_i32 : i32
    %188 = arith.extui %187 : i1 to i32
    %c0_i32_91 = arith.constant 0 : i32
    %189 = arith.cmpi ne, %188, %c0_i32_91 : i32
    scf.if %189 {
      %190 = vector.broadcast %5 : vector<16x1xf32> to vector<16x128xf32>
      %191 = arith.mulf %185, %190 : vector<16x128xf32>
      %c0_92 = arith.constant 0 : index
      %c0_93 = arith.constant 0 : index
      %c0_94 = arith.constant 0 : index
      %192 = vector.load %arg21[%c0_92, %c0_93, %c0_94] : memref<1x16x128xf32, #tpu.memory_space<vmem>>, vector<1x16x128xf32>
      %193 = vector.shape_cast %192 : vector<1x16x128xf32> to vector<16x128xf32>
      %194 = vector.shape_cast %191 : vector<16x128xf32> to vector<1x16x128xf32>
      tpu.vector_store %arg21[%c0_92, %c0_93, %c0_94], %194 {strides = array<i32>} : memref<1x16x128xf32, #tpu.memory_space<vmem>>, vector<1x16x128xf32>,
    } else {
    }
    return
  }
  func.func @transform_0(%arg0: i32, %arg1: i32) -> (i32, i32, i32) {
    %c0_i32 = arith.constant 0 : i32
    %c0_i32_0 = arith.constant 0 : i32
    %c0_i32_1 = arith.constant 0 : i32
    return %arg0, %c0_i32, %c0_i32_0 : i32, i32, i32
  }
  func.func @transform_1(%arg0: i32, %arg1: i32) -> (i32, i32, i32) {
    %c0_i32 = arith.constant 0 : i32
    %c0_i32_0 = arith.constant 0 : i32
    %c0_i32_1 = arith.constant 0 : i32
    return %arg0, %c0_i32, %c0_i32_0 : i32, i32, i32
  }
  func.func @transform_2(%arg0: i32, %arg1: i32) -> (i32, i32, i32) {
    %c0_i32 = arith.constant 0 : i32
    %c0_i32_0 = arith.constant 0 : i32
    %c0_i32_1 = arith.constant 0 : i32
    return %arg0, %c0_i32, %c0_i32_0 : i32, i32, i32
  }
  func.func @transform_3(%arg0: i32, %arg1: i32) -> (i32, i32, i32) {
    %c0_i32 = arith.constant 0 : i32
    %c0_i32_0 = arith.constant 0 : i32
    %c0_i32_1 = arith.constant 0 : i32
    return %arg1, %c0_i32, %c0_i32_0 : i32, i32, i32
  }
  func.func @transform_4(%arg0: i32, %arg1: i32) -> (i32, i32, i32) {
    %c0_i32 = arith.constant 0 : i32
    %c0_i32_0 = arith.constant 0 : i32
    %c0_i32_1 = arith.constant 0 : i32
    return %arg1, %c0_i32, %c0_i32_0 : i32, i32, i32
  }
  func.func @transform_5(%arg0: i32, %arg1: i32) -> (i32, i32, i32) {
    %c0_i32 = arith.constant 0 : i32
    %c0_i32_0 = arith.constant 0 : i32
    %c0_i32_1 = arith.constant 0 : i32
    return %arg1, %c0_i32, %c0_i32_0 : i32, i32, i32
  }
  func.func @transform_6(%arg0: i32, %arg1: i32) -> (i32, i32, i32) {
    %c0_i32 = arith.constant 0 : i32
    %c0_i32_0 = arith.constant 0 : i32
    %c0_i32_1 = arith.constant 0 : i32
    return %arg1, %c0_i32, %c0_i32_0 : i32, i32, i32
  }
  func.func @transform_7(%arg0: i32, %arg1: i32) -> (i32, i32, i32) {
    %c0_i32 = arith.constant 0 : i32
    %c0_i32_0 = arith.constant 0 : i32
    %c0_i32_1 = arith.constant 0 : i32
    return %arg1, %c0_i32, %c0_i32_0 : i32, i32, i32
  }
  func.func @transform_8(%arg0: i32, %arg1: i32) -> (i32, i32, i32) {
    %c0_i32 = arith.constant 0 : i32
    %c0_i32_0 = arith.constant 0 : i32
    %c0_i32_1 = arith.constant 0 : i32
    return %arg1, %c0_i32, %c0_i32_0 : i32, i32, i32
  }
  func.func @transform_9(%arg0: i32, %arg1: i32) -> (i32, i32, i32) {
    %c0_i32 = arith.constant 0 : i32
    %c0_i32_0 = arith.constant 0 : i32
    %c0_i32_1 = arith.constant 0 : i32
    return %arg1, %c0_i32, %c0_i32_0 : i32, i32, i32
  }
  func.func @transform_10(%arg0: i32, %arg1: i32) -> (i32, i32, i32) {
    %c0_i32 = arith.constant 0 : i32
    %c0_i32_0 = arith.constant 0 : i32
    %c0_i32_1 = arith.constant 0 : i32
    return %arg1, %c0_i32, %c0_i32_0 : i32, i32, i32
  }
  func.func @transform_11(%arg0: i32, %arg1: i32) -> (i32, i32, i32) {
    %c0_i32 = arith.constant 0 : i32
    %c0_i32_0 = arith.constant 0 : i32
    %c0_i32_1 = arith.constant 0 : i32
    return %arg1, %c0_i32, %c0_i32_0 : i32, i32, i32
  }
  func.func @transform_12(%arg0: i32, %arg1: i32) -> (i32, i32, i32) {
    %c0_i32 = arith.constant 0 : i32
    %c0_i32_0 = arith.constant 0 : i32
    %c0_i32_1 = arith.constant 0 : i32
    return %arg1, %c0_i32, %c0_i32_0 : i32, i32, i32
  }
  func.func @transform_13(%arg0: i32, %arg1: i32) -> (i32, i32, i32) {
    %c0_i32 = arith.constant 0 : i32
    %c0_i32_0 = arith.constant 0 : i32
    %c0_i32_1 = arith.constant 0 : i32
    return %arg1, %c0_i32, %c0_i32_0 : i32, i32, i32
  }
  func.func @transform_14(%arg0: i32, %arg1: i32) -> (i32, i32, i32) {
    %c0_i32 = arith.constant 0 : i32
    %c0_i32_0 = arith.constant 0 : i32
    %c0_i32_1 = arith.constant 0 : i32
    return %arg1, %c0_i32, %c0_i32_0 : i32, i32, i32
  }
  func.func @transform_15(%arg0: i32, %arg1: i32) -> (i32, i32, i32) {
    %c0_i32 = arith.constant 0 : i32
    %c0_i32_0 = arith.constant 0 : i32
    %c0_i32_1 = arith.constant 0 : i32
    return %arg1, %c0_i32, %c0_i32_0 : i32, i32, i32
  }
  func.func @transform_16(%arg0: i32, %arg1: i32) -> (i32, i32, i32) {
    %c0_i32 = arith.constant 0 : i32
    %c0_i32_0 = arith.constant 0 : i32
    %c0_i32_1 = arith.constant 0 : i32
    return %arg1, %c0_i32, %c0_i32_0 : i32, i32, i32
  }
  func.func @transform_17(%arg0: i32, %arg1: i32) -> (i32, i32, i32) {
    %c0_i32 = arith.constant 0 : i32
    %c0_i32_0 = arith.constant 0 : i32
    %c0_i32_1 = arith.constant 0 : i32
    return %arg1, %c0_i32, %c0_i32_0 : i32, i32, i32
  }
  func.func @transform_18(%arg0: i32, %arg1: i32) -> (i32, i32, i32) {
    %c0_i32 = arith.constant 0 : i32
    %c0_i32_0 = arith.constant 0 : i32
    %c0_i32_1 = arith.constant 0 : i32
    return %arg1, %c0_i32, %c0_i32_0 : i32, i32, i32
  }
  func.func @transform_19(%arg0: i32, %arg1: i32) -> (i32, i32, i32) {
    %c0_i32 = arith.constant 0 : i32
    %c0_i32_0 = arith.constant 0 : i32
    %c0_i32_1 = arith.constant 0 : i32
    return %arg0, %c0_i32, %c0_i32_0 : i32, i32, i32
  }
}

</mosaic_0001>

<llo_original>
// kernel: tpu_custom_call.1
$region0: #{tpu_custom_call.1}
  #allocation0 [shape = 'u32[]', space=smem, size = 0x4, offset = 0x4, fixed_abs, tag = 'smem constant byte address 0x4 - core index']
  #allocation1 [shape = 'u32[72,128]{1,0:T(1,128)}', space=vmem, size = 0x9000, scoped, tag = 'internal scratch']
  #allocation2 [shape = 'f32[16,128]{1,0:T(8,128)}', space=vmem, size = 0x2000, scoped, tag = 'scratch operand']
  %s0 = inlined_call_operand.vmem [shape: f32[2,16,128], index: 0, kind: input, shape index: {}]
  %s1 = inlined_call_operand.vmem [shape: f32[2,16,1], index: 1, kind: input, shape index: {}]
  %s2 = inlined_call_operand.vmem [shape: f32[2,1,16], index: 2, kind: input, shape index: {}]
  %s3 = inlined_call_operand.hbm [shape: bf16[2,128,128], index: 3, kind: input, shape index: {}]
  %s4 = inlined_call_operand.vmem [shape: f32[2,1,128], index: 4, kind: input, shape index: {}]
  %s5 = inlined_call_operand.hbm [shape: bf16[2,128,128], index: 5, kind: input, shape index: {}]
  %s6 = inlined_call_operand.vmem [shape: f32[2,1,128], index: 6, kind: input, shape index: {}]
  %s7 = inlined_call_operand.hbm [shape: bf16[2,128,128], index: 7, kind: input, shape index: {}]
  %s8 = inlined_call_operand.vmem [shape: f32[2,1,128], index: 8, kind: input, shape index: {}]
  %s9 = inlined_call_operand.hbm [shape: bf16[2,128,128], index: 9, kind: input, shape index: {}]
  %s10 = inlined_call_operand.vmem [shape: f32[2,1,128], index: 10, kind: input, shape index: {}]
  %s11 = inlined_call_operand.vmem [shape: f32[2,1,128], index: 11, kind: input, shape index: {}]
  %s12 = inlined_call_operand.hbm [shape: f32[2,1,128], index: 12, kind: input, shape index: {}]
  %s13 = inlined_call_operand.hbm [shape: bf16[2,384,128], index: 13, kind: input, shape index: {}]
  %s14 = inlined_call_operand.vmem [shape: f32[2,1,128], index: 14, kind: input, shape index: {}]
  %s15 = inlined_call_operand.hbm [shape: bf16[2,384,128], index: 15, kind: input, shape index: {}]
  %s16 = inlined_call_operand.vmem [shape: f32[2,1,128], index: 16, kind: input, shape index: {}]
  %s17 = inlined_call_operand.vmem [shape: f32[2,1,128], index: 17, kind: input, shape index: {}]
  %s18 = inlined_call_operand.hbm [shape: f32[2,1,128], index: 18, kind: input, shape index: {}]
  %s19 = inlined_call_operand.hbm [shape: f32[2,16,128], index: 19, kind: output, shape index: {}]
  %s20 = sld [smem:[#allocation0]]
  $region149: #{tpu_custom_call.1} parent=0
    _
  %s22 = ssub.s32 1, %s20
  %s23 = scalar_select 0, %s22, %s20
  $region1: #{tpu_custom_call.1} parent=0
    #allocation3 [shape = 'u8[65536]{0}', space=vmem, size = 0x10000, scoped, tag = 'input window, operand 3']
    #allocation4 [shape = 's32[2]{0}', space=sflag, size = 0x8, scoped, tag = 'scoped memory for tpu_custom_call.1']
    #allocation5 [shape = 's32[2]{0}', space=sflag, size = 0x8, scoped, tag = 'scoped memory for tpu_custom_call.1']
    #allocation6 [shape = 'u8[65536]{0}', space=vmem, size = 0x10000, scoped, tag = 'input window, operand 5']
    #allocation7 [shape = 's32[2]{0}', space=sflag, size = 0x8, scoped, tag = 'scoped memory for tpu_custom_call.1']
    #allocation8 [shape = 'u8[65536]{0}', space=vmem, size = 0x10000, scoped, tag = 'input window, operand 7']
    #allocation9 [shape = 'u8[65536]{0}', space=vmem, size = 0x10000, scoped, tag = 'input window, operand 9']
    #allocation10 [shape = 's32[2]{0}', space=sflag, size = 0x8, scoped, tag = 'scoped memory for tpu_custom_call.1']
    #allocation11 [shape = 'u8[1024]{0}', space=vmem, size = 0x400, scoped, tag = 'input window, operand 12']
    #allocation12 [shape = 'u8[196608]{0}', space=vmem, size = 0x30000, scoped, tag = 'input window, operand 13']
    #allocation13 [shape = 's32[2]{0}', space=sflag, size = 0x8, scoped, tag = 'scoped memory for tpu_custom_call.1']
    #allocation14 [shape = 'u8[196608]{0}', space=vmem, size = 0x30000, scoped, tag = 'input window, operand 15']
    #allocation15 [shape = 'u8[1024]{0}', space=vmem, size = 0x400, scoped, tag = 'input window, operand 18']
    #allocation16 [shape = 's32[2]{0}', space=sflag, size = 0x8, scoped, tag = 'scoped memory for tpu_custom_call.1']
    #allocation17 [shape = 'u8[16384]{0}', space=vmem, size = 0x4000, scoped, tag = 'output window, operand 0']
    %24 = vsyncpa [#allocation4], 0
    %s25 = scalar_lea.sflag [#allocation4], 1
    %26 = vsyncpa %s25, 0
    %27 = vsyncpa [#allocation7], 0
    %s28 = scalar_lea.sflag [#allocation7], 1
    %29 = vsyncpa %s28, 0
    %30 = vsyncpa [#allocation10], 0
    %s31 = scalar_lea.sflag [#allocation10], 1
    %32 = vsyncpa %s31, 0
    %33 = vsyncpa [#allocation13], 0
    %s34 = scalar_lea.sflag [#allocation13], 1
    %35 = vsyncpa %s34, 0
    %36 = vsyncpa [#allocation16], 0
    %s37 = scalar_lea.sflag [#allocation16], 1
    %38 = vsyncpa %s37, 0
    %39 = vsyncpa [#allocation5], 0
    %s40 = scalar_lea.sflag [#allocation5], 1
    %41 = vsyncpa %s40, 0
    loop: start=0, step=1, limit=6
    $region2: #{tpu_custom_call.1} parent=1 // loop_pre_header
      _
    $region3: #{tpu_custom_call.1} parent=1 // loop_header
      %s43 = sphi 0, %s47
      %p44 = scmp.ge.s32.totalorder %s43, 6
      %s50 = sphi 0, %s62
      %s51 = sphi 0, %s58
      %s52 = sphi 0, %s50
      %s53 = sphi 0, %s51
      %s54 = sphi 0, %s52
      %s55 = sphi 0, %s53
      %s65 = sphi 0, %s67
      %s68 = sphi 0, %s65
      %s69 = sphi 0, %s68
      %s85 = sphi 0, %s69
      %s91 = sphi 0, %s93
      %s94 = sphi 0, %s91
      %s95 = sphi 0, %s94
      %s111 = sphi 0, %s95
      %s117 = sphi 0, %s119
      %s120 = sphi 0, %s117
      %s121 = sphi 0, %s120
      %s137 = sphi 0, %s121
      %s143 = sphi 0, %s145
      %s146 = sphi 0, %s143
      %s147 = sphi 0, %s146
      %s163 = sphi 0, %s147
      %s169 = sphi 0, %s171
      %s172 = sphi 0, %s169
      %s173 = sphi 0, %s172
      %s189 = sphi 0, %s173
      %s195 = sphi 0, %s197
      %s198 = sphi 0, %s195
      %s199 = sphi 0, %s198
      %s215 = sphi 0, %s199
      %s221 = sphi 0, %s223
      %s224 = sphi 0, %s221
      %s225 = sphi 0, %s224
      %s241 = sphi 0, %s225
      %s247 = sphi 0, %s249
      %s250 = sphi 0, %s247
      %s251 = sphi 0, %s250
      %s267 = sphi 0, %s251
      %s273 = sphi 0, %s275
      %s276 = sphi 0, %s273
      %s277 = sphi 0, %s276
      %s293 = sphi 0, %s277
      %s299 = sphi 0, %s301
      %s302 = sphi 0, %s299
      %s303 = sphi 0, %s302
      %s319 = sphi 0, %s303
      %s325 = sphi 0, %s327
      %s328 = sphi 0, %s325
      %s329 = sphi 0, %s328
      %s345 = sphi 0, %s329
      %s351 = sphi 0, %s353
      %s354 = sphi 0, %s351
      %s355 = sphi 0, %s354
      %s371 = sphi 0, %s355
      %s377 = sphi 0, %s379
      %s380 = sphi 0, %s377
      %s381 = sphi 0, %s380
      %s397 = sphi 0, %s381
      %s403 = sphi 0, %s405
      %s406 = sphi 0, %s403
      %s407 = sphi 0, %s406
      %s423 = sphi 0, %s407
      %s429 = sphi 0, %s431
      %s432 = sphi 0, %s429
      %s433 = sphi 0, %s432
      %s449 = sphi 0, %s433
      %s455 = sphi 0, %s457
      %s458 = sphi 0, %s455
      %s459 = sphi 0, %s458
      %s475 = sphi 0, %s459
      %s481 = sphi 0, %s483
      %s484 = sphi 0, %s481
      %s485 = sphi 0, %s484
      %s501 = sphi 0, %s485
      %s507 = sphi 0, %s509
      %s510 = sphi 0, %s507
      %s511 = sphi 0, %s510
      %s527 = sphi 0, %s511
      %s533 = sphi 0, %s535
      %s536 = sphi 0, %s533
      %s537 = sphi 0, %s536
      %s553 = sphi 0, %s537
      %s559 = sphi 0, %s561
      %s562 = sphi 0, %s559
      %s563 = sphi 0, %s562
      %s579 = sphi 0, %s563
    $region4: #{tpu_custom_call.1} parent=1 // loop_header_branch
      %46 = sbr.rel (%p44) target = $region8
    $region5: #{tpu_custom_call.1} parent=1 // loop_body
      %s48 = ssub.s32 %s43, 1
      %s49 = ssub.s32 %s43, 2
      %s56 = sadd.s32 1, %s51
      %p57 = scmp.ge.s32.totalorder %s56, 2
      %s58 = scalar_select %p57, 0, %s56
      %s59 = sadd.s32 1, %s50
      %s60 = scalar_select %p57, %s59, %s50
      %p61 = scmp.ge.s32.totalorder %s60, 2
      %s62 = scalar_select %p61, 0, %s60
      %s63 = ssub.s32 %s50, %s62
      %p64 = scmp.eq.s32.totalorder %s63, 0
      %s66 = sadd.s32 %s65, 1
      %s67 = scalar_select %p64, %s65, %s66
      %p70 = pneg %p64
      %p71 = scmp.eq.s32.totalorder %s43, 3
      %p72 = por %p70, %p71
      %p73 = scmp.ne.s32.totalorder %s65, %s68
      %p74 = scmp.eq.s32.totalorder %s43, 0
      %p75 = por %p73, %p74
      %p76 = scmp.ne.s32.totalorder %s65, %s68
      %p77 = scmp.eq.s32.totalorder %s48, 3
      %p78 = por %p76, %p77
      %p79 = scmp.ne.s32.totalorder %s68, %s69
      %p80 = scmp.eq.s32.totalorder %s48, 0
      %p81 = por %p79, %p80
      %p82 = scmp.ne.s32.totalorder %s68, %s69
      %p83 = scmp.eq.s32.totalorder %s49, 3
      %p84 = por %p82, %p83
      %p86 = scmp.ne.s32.totalorder %s69, %s85
      %p87 = scmp.eq.s32.totalorder %s49, 0
      %p88 = por %p86, %p87
      %s89 = ssub.s32 %s50, %s62
      %p90 = scmp.eq.s32.totalorder %s89, 0
      %s92 = sadd.s32 %s91, 1
      %s93 = scalar_select %p90, %s91, %s92
      %p96 = pneg %p90
      %p97 = scmp.eq.s32.totalorder %s43, 3
      %p98 = por %p96, %p97
      %p99 = scmp.ne.s32.totalorder %s91, %s94
      %p100 = scmp.eq.s32.totalorder %s43, 0
      %p101 = por %p99, %p100
      %p102 = scmp.ne.s32.totalorder %s91, %s94
      %p103 = scmp.eq.s32.totalorder %s48, 3
      %p104 = por %p102, %p103
      %p105 = scmp.ne.s32.totalorder %s94, %s95
      %p106 = scmp.eq.s32.totalorder %s48, 0
      %p107 = por %p105, %p106
      %p108 = scmp.ne.s32.totalorder %s94, %s95
      %p109 = scmp.eq.s32.totalorder %s49, 3
      %p110 = por %p108, %p109
      %p112 = scmp.ne.s32.totalorder %s95, %s111
      %p113 = scmp.eq.s32.totalorder %s49, 0
      %p114 = por %p112, %p113
      %s115 = ssub.s32 %s50, %s62
      %p116 = scmp.eq.s32.totalorder %s115, 0
      %s118 = sadd.s32 %s117, 1
      %s119 = scalar_select %p116, %s117, %s118
      %p122 = pneg %p116
      %p123 = scmp.eq.s32.totalorder %s43, 3
      %p124 = por %p122, %p123
      %p125 = scmp.ne.s32.totalorder %s117, %s120
      %p126 = scmp.eq.s32.totalorder %s43, 0
      %p127 = por %p125, %p126
      %p128 = scmp.ne.s32.totalorder %s117, %s120
      %p129 = scmp.eq.s32.totalorder %s48, 3
      %p130 = por %p128, %p129
      %p131 = scmp.ne.s32.totalorder %s120, %s121
      %p132 = scmp.eq.s32.totalorder %s48, 0
      %p133 = por %p131, %p132
      %p134 = scmp.ne.s32.totalorder %s120, %s121
      %p135 = scmp.eq.s32.totalorder %s49, 3
      %p136 = por %p134, %p135
      %p138 = scmp.ne.s32.totalorder %s121, %s137
      %p139 = scmp.eq.s32.totalorder %s49, 0
      %p140 = por %p138, %p139
      %s141 = ssub.s32 %s51, %s58
      %p142 = scmp.eq.s32.totalorder %s141, 0
      %s144 = sadd.s32 %s143, 1
      %s145 = scalar_select %p142, %s143, %s144
      %p148 = pneg %p142
      %p149 = scmp.eq.s32.totalorder %s43, 3
      %p150 = por %p148, %p149
      %p151 = scmp.ne.s32.totalorder %s143, %s146
      %p152 = scmp.eq.s32.totalorder %s43, 0
      %p153 = por %p151, %p152
      %p154 = scmp.ne.s32.totalorder %s143, %s146
      %p155 = scmp.eq.s32.totalorder %s48, 3
      %p156 = por %p154, %p155
      %p157 = scmp.ne.s32.totalorder %s146, %s147
      %p158 = scmp.eq.s32.totalorder %s48, 0
      %p159 = por %p157, %p158
      %p160 = scmp.ne.s32.totalorder %s146, %s147
      %p161 = scmp.eq.s32.totalorder %s49, 3
      %p162 = por %p160, %p161
      %p164 = scmp.ne.s32.totalorder %s147, %s163
      %p165 = scmp.eq.s32.totalorder %s49, 0
      %p166 = por %p164, %p165
      %s167 = ssub.s32 %s51, %s58
      %p168 = scmp.eq.s32.totalorder %s167, 0
      %s170 = sadd.s32 %s169, 1
      %s171 = scalar_select %p168, %s169, %s170
      %p174 = pneg %p168
      %p175 = scmp.eq.s32.totalorder %s43, 3
      %p176 = por %p174, %p175
      %p177 = scmp.ne.s32.totalorder %s169, %s172
      %p178 = scmp.eq.s32.totalorder %s43, 0
      %p179 = por %p177, %p178
      %p180 = scmp.ne.s32.totalorder %s169, %s172
      %p181 = scmp.eq.s32.totalorder %s48, 3
      %p182 = por %p180, %p181
      %p183 = scmp.ne.s32.totalorder %s172, %s173
      %p184 = scmp.eq.s32.totalorder %s48, 0
      %p185 = por %p183, %p184
      %p186 = scmp.ne.s32.totalorder %s172, %s173
      %p187 = scmp.eq.s32.totalorder %s49, 3
      %p188 = por %p186, %p187
      %p190 = scmp.ne.s32.totalorder %s173, %s189
      %p191 = scmp.eq.s32.totalorder %s49, 0
      %p192 = por %p190, %p191
      %s193 = ssub.s32 %s51, %s58
      %p194 = scmp.eq.s32.totalorder %s193, 0
      %s196 = sadd.s32 %s195, 1
      %s197 = scalar_select %p194, %s195, %s196
      %p200 = pneg %p194
      %p201 = scmp.eq.s32.totalorder %s43, 3
      %p202 = por %p200, %p201
      %p203 = scmp.ne.s32.totalorder %s195, %s198
      %p204 = scmp.eq.s32.totalorder %s43, 0
      %p205 = por %p203, %p204
      %p206 = scmp.ne.s32.totalorder %s195, %s198
      %p207 = scmp.eq.s32.totalorder %s48, 3
      %p208 = por %p206, %p207
      %p209 = scmp.ne.s32.totalorder %s198, %s199
      %p210 = scmp.eq.s32.totalorder %s48, 0
      %p211 = por %p209, %p210
      %p212 = scmp.ne.s32.totalorder %s198, %s199
      %p213 = scmp.eq.s32.totalorder %s49, 3
      %p214 = por %p212, %p213
      %p216 = scmp.ne.s32.totalorder %s199, %s215
      %p217 = scmp.eq.s32.totalorder %s49, 0
      %p218 = por %p216, %p217
      %s219 = ssub.s32 %s51, %s58
      %p220 = scmp.eq.s32.totalorder %s219, 0
      %s222 = sadd.s32 %s221, 1
      %s223 = scalar_select %p220, %s221, %s222
      %p226 = pneg %p220
      %p227 = scmp.eq.s32.totalorder %s43, 3
      %p228 = por %p226, %p227
      %p229 = scmp.ne.s32.totalorder %s221, %s224
      %p230 = scmp.eq.s32.totalorder %s43, 0
      %p231 = por %p229, %p230
      %p232 = scmp.ne.s32.totalorder %s221, %s224
      %p233 = scmp.eq.s32.totalorder %s48, 3
      %p234 = por %p232, %p233
      %p235 = scmp.ne.s32.totalorder %s224, %s225
      %p236 = scmp.eq.s32.totalorder %s48, 0
      %p237 = por %p235, %p236
      %p238 = scmp.ne.s32.totalorder %s224, %s225
      %p239 = scmp.eq.s32.totalorder %s49, 3
      %p240 = por %p238, %p239
      %p242 = scmp.ne.s32.totalorder %s225, %s241
      %p243 = scmp.eq.s32.totalorder %s49, 0
      %p244 = por %p242, %p243
      %s245 = ssub.s32 %s51, %s58
      %p246 = scmp.eq.s32.totalorder %s245, 0
      %s248 = sadd.s32 %s247, 1
      %s249 = scalar_select %p246, %s247, %s248
      %p252 = pneg %p246
      %p253 = scmp.eq.s32.totalorder %s43, 3
      %p254 = por %p252, %p253
      %p255 = scmp.ne.s32.totalorder %s247, %s250
      %p256 = scmp.eq.s32.totalorder %s43, 0
      %p257 = por %p255, %p256
      %p258 = scmp.ne.s32.totalorder %s247, %s250
      %p259 = scmp.eq.s32.totalorder %s48, 3
      %p260 = por %p258, %p259
      %p261 = scmp.ne.s32.totalorder %s250, %s251
      %p262 = scmp.eq.s32.totalorder %s48, 0
      %p263 = por %p261, %p262
      %p264 = scmp.ne.s32.totalorder %s250, %s251
      %p265 = scmp.eq.s32.totalorder %s49, 3
      %p266 = por %p264, %p265
      %p268 = scmp.ne.s32.totalorder %s251, %s267
      %p269 = scmp.eq.s32.totalorder %s49, 0
      %p270 = por %p268, %p269
      %s271 = ssub.s32 %s51, %s58
      %p272 = scmp.eq.s32.totalorder %s271, 0
      %s274 = sadd.s32 %s273, 1
      %s275 = scalar_select %p272, %s273, %s274
      %p278 = pneg %p272
      %p279 = scmp.eq.s32.totalorder %s43, 3
      %p280 = por %p278, %p279
      %p281 = scmp.ne.s32.totalorder %s273, %s276
      %p282 = scmp.eq.s32.totalorder %s43, 0
      %p283 = por %p281, %p282
      %p284 = scmp.ne.s32.totalorder %s273, %s276
      %p285 = scmp.eq.s32.totalorder %s48, 3
      %p286 = por %p284, %p285
      %p287 = scmp.ne.s32.totalorder %s276, %s277
      %p288 = scmp.eq.s32.totalorder %s48, 0
      %p289 = por %p287, %p288
      %p290 = scmp.ne.s32.totalorder %s276, %s277
      %p291 = scmp.eq.s32.totalorder %s49, 3
      %p292 = por %p290, %p291
      %p294 = scmp.ne.s32.totalorder %s277, %s293
      %p295 = scmp.eq.s32.totalorder %s49, 0
      %p296 = por %p294, %p295
      %s297 = ssub.s32 %s51, %s58
      %p298 = scmp.eq.s32.totalorder %s297, 0
      %s300 = sadd.s32 %s299, 1
      %s301 = scalar_select %p298, %s299, %s300
      %p304 = pneg %p298
      %p305 = scmp.eq.s32.totalorder %s43, 3
      %p306 = por %p304, %p305
      %p307 = scmp.ne.s32.totalorder %s299, %s302
      %p308 = scmp.eq.s32.totalorder %s43, 0
      %p309 = por %p307, %p308
      %p310 = scmp.ne.s32.totalorder %s299, %s302
      %p311 = scmp.eq.s32.totalorder %s48, 3
      %p312 = por %p310, %p311
      %p313 = scmp.ne.s32.totalorder %s302, %s303
      %p314 = scmp.eq.s32.totalorder %s48, 0
      %p315 = por %p313, %p314
      %p316 = scmp.ne.s32.totalorder %s302, %s303
      %p317 = scmp.eq.s32.totalorder %s49, 3
      %p318 = por %p316, %p317
      %p320 = scmp.ne.s32.totalorder %s303, %s319
      %p321 = scmp.eq.s32.totalorder %s49, 0
      %p322 = por %p320, %p321
      %s323 = ssub.s32 %s51, %s58
      %p324 = scmp.eq.s32.totalorder %s323, 0
      %s326 = sadd.s32 %s325, 1
      %s327 = scalar_select %p324, %s325, %s326
      %p330 = pneg %p324
      %p331 = scmp.eq.s32.totalorder %s43, 3
      %p332 = por %p330, %p331
      %p333 = scmp.ne.s32.totalorder %s325, %s328
      %p334 = scmp.eq.s32.totalorder %s43, 0
      %p335 = por %p333, %p334
      %p336 = scmp.ne.s32.totalorder %s325, %s328
      %p337 = scmp.eq.s32.totalorder %s48, 3
      %p338 = por %p336, %p337
      %p339 = scmp.ne.s32.totalorder %s328, %s329
      %p340 = scmp.eq.s32.totalorder %s48, 0
      %p341 = por %p339, %p340
      %p342 = scmp.ne.s32.totalorder %s328, %s329
      %p343 = scmp.eq.s32.totalorder %s49, 3
      %p344 = por %p342, %p343
      %p346 = scmp.ne.s32.totalorder %s329, %s345
      %p347 = scmp.eq.s32.totalorder %s49, 0
      %p348 = por %p346, %p347
      %s349 = ssub.s32 %s51, %s58
      %p350 = scmp.eq.s32.totalorder %s349, 0
      %s352 = sadd.s32 %s351, 1
      %s353 = scalar_select %p350, %s351, %s352
      %p356 = pneg %p350
      %p357 = scmp.eq.s32.totalorder %s43, 3
      %p358 = por %p356, %p357
      %p359 = scmp.ne.s32.totalorder %s351, %s354
      %p360 = scmp.eq.s32.totalorder %s43, 0
      %p361 = por %p359, %p360
      %p362 = scmp.ne.s32.totalorder %s351, %s354
      %p363 = scmp.eq.s32.totalorder %s48, 3
      %p364 = por %p362, %p363
      %p365 = scmp.ne.s32.totalorder %s354, %s355
      %p366 = scmp.eq.s32.totalorder %s48, 0
      %p367 = por %p365, %p366
      %p368 = scmp.ne.s32.totalorder %s354, %s355
      %p369 = scmp.eq.s32.totalorder %s49, 3
      %p370 = por %p368, %p369
      %p372 = scmp.ne.s32.totalorder %s355, %s371
      %p373 = scmp.eq.s32.totalorder %s49, 0
      %p374 = por %p372, %p373
      %s375 = ssub.s32 %s51, %s58
      %p376 = scmp.eq.s32.totalorder %s375, 0
      %s378 = sadd.s32 %s377, 1
      %s379 = scalar_select %p376, %s377, %s378
      %p382 = pneg %p376
      %p383 = scmp.eq.s32.totalorder %s43, 3
      %p384 = por %p382, %p383
      %p385 = scmp.ne.s32.totalorder %s377, %s380
      %p386 = scmp.eq.s32.totalorder %s43, 0
      %p387 = por %p385, %p386
      %p388 = scmp.ne.s32.totalorder %s377, %s380
      %p389 = scmp.eq.s32.totalorder %s48, 3
      %p390 = por %p388, %p389
      %p391 = scmp.ne.s32.totalorder %s380, %s381
      %p392 = scmp.eq.s32.totalorder %s48, 0
      %p393 = por %p391, %p392
      %p394 = scmp.ne.s32.totalorder %s380, %s381
      %p395 = scmp.eq.s32.totalorder %s49, 3
      %p396 = por %p394, %p395
      %p398 = scmp.ne.s32.totalorder %s381, %s397
      %p399 = scmp.eq.s32.totalorder %s49, 0
      %p400 = por %p398, %p399
      %s401 = ssub.s32 %s51, %s58
      %p402 = scmp.eq.s32.totalorder %s401, 0
      %s404 = sadd.s32 %s403, 1
      %s405 = scalar_select %p402, %s403, %s404
      %p408 = pneg %p402
      %p409 = scmp.eq.s32.totalorder %s43, 3
      %p410 = por %p408, %p409
      %p411 = scmp.ne.s32.totalorder %s403, %s406
      %p412 = scmp.eq.s32.totalorder %s43, 0
      %p413 = por %p411, %p412
      %p414 = scmp.ne.s32.totalorder %s403, %s406
      %p415 = scmp.eq.s32.totalorder %s48, 3
      %p416 = por %p414, %p415
      %p417 = scmp.ne.s32.totalorder %s406, %s407
      %p418 = scmp.eq.s32.totalorder %s48, 0
      %p419 = por %p417, %p418
      %p420 = scmp.ne.s32.totalorder %s406, %s407
      %p421 = scmp.eq.s32.totalorder %s49, 3
      %p422 = por %p420, %p421
      %p424 = scmp.ne.s32.totalorder %s407, %s423
      %p425 = scmp.eq.s32.totalorder %s49, 0
      %p426 = por %p424, %p425
      %s427 = ssub.s32 %s51, %s58
      %p428 = scmp.eq.s32.totalorder %s427, 0
      %s430 = sadd.s32 %s429, 1
      %s431 = scalar_select %p428, %s429, %s430
      %p434 = pneg %p428
      %p435 = scmp.eq.s32.totalorder %s43, 3
      %p436 = por %p434, %p435
      %p437 = scmp.ne.s32.totalorder %s429, %s432
      %p438 = scmp.eq.s32.totalorder %s43, 0
      %p439 = por %p437, %p438
      %p440 = scmp.ne.s32.totalorder %s429, %s432
      %p441 = scmp.eq.s32.totalorder %s48, 3
      %p442 = por %p440, %p441
      %p443 = scmp.ne.s32.totalorder %s432, %s433
      %p444 = scmp.eq.s32.totalorder %s48, 0
      %p445 = por %p443, %p444
      %p446 = scmp.ne.s32.totalorder %s432, %s433
      %p447 = scmp.eq.s32.totalorder %s49, 3
      %p448 = por %p446, %p447
      %p450 = scmp.ne.s32.totalorder %s433, %s449
      %p451 = scmp.eq.s32.totalorder %s49, 0
      %p452 = por %p450, %p451
      %s453 = ssub.s32 %s51, %s58
      %p454 = scmp.eq.s32.totalorder %s453, 0
      %s456 = sadd.s32 %s455, 1
      %s457 = scalar_select %p454, %s455, %s456
      %p460 = pneg %p454
      %p461 = scmp.eq.s32.totalorder %s43, 3
      %p462 = por %p460, %p461
      %p463 = scmp.ne.s32.totalorder %s455, %s458
      %p464 = scmp.eq.s32.totalorder %s43, 0
      %p465 = por %p463, %p464
      %p466 = scmp.ne.s32.totalorder %s455, %s458
      %p467 = scmp.eq.s32.totalorder %s48, 3
      %p468 = por %p466, %p467
      %p469 = scmp.ne.s32.totalorder %s458, %s459
      %p470 = scmp.eq.s32.totalorder %s48, 0
      %p471 = por %p469, %p470
      %p472 = scmp.ne.s32.totalorder %s458, %s459
      %p473 = scmp.eq.s32.totalorder %s49, 3
      %p474 = por %p472, %p473
      %p476 = scmp.ne.s32.totalorder %s459, %s475
      %p477 = scmp.eq.s32.totalorder %s49, 0
      %p478 = por %p476, %p477
      %s479 = ssub.s32 %s51, %s58
      %p480 = scmp.eq.s32.totalorder %s479, 0
      %s482 = sadd.s32 %s481, 1
      %s483 = scalar_select %p480, %s481, %s482
      %p486 = pneg %p480
      %p487 = scmp.eq.s32.totalorder %s43, 3
      %p488 = por %p486, %p487
      %p489 = scmp.ne.s32.totalorder %s481, %s484
      %p490 = scmp.eq.s32.totalorder %s43, 0
      %p491 = por %p489, %p490
      %p492 = scmp.ne.s32.totalorder %s481, %s484
      %p493 = scmp.eq.s32.totalorder %s48, 3
      %p494 = por %p492, %p493
      %p495 = scmp.ne.s32.totalorder %s484, %s485
      %p496 = scmp.eq.s32.totalorder %s48, 0
      %p497 = por %p495, %p496
      %p498 = scmp.ne.s32.totalorder %s484, %s485
      %p499 = scmp.eq.s32.totalorder %s49, 3
      %p500 = por %p498, %p499
      %p502 = scmp.ne.s32.totalorder %s485, %s501
      %p503 = scmp.eq.s32.totalorder %s49, 0
      %p504 = por %p502, %p503
      %s505 = ssub.s32 %s51, %s58
      %p506 = scmp.eq.s32.totalorder %s505, 0
      %s508 = sadd.s32 %s507, 1
      %s509 = scalar_select %p506, %s507, %s508
      %p512 = pneg %p506
      %p513 = scmp.eq.s32.totalorder %s43, 3
      %p514 = por %p512, %p513
      %p515 = scmp.ne.s32.totalorder %s507, %s510
      %p516 = scmp.eq.s32.totalorder %s43, 0
      %p517 = por %p515, %p516
      %p518 = scmp.ne.s32.totalorder %s507, %s510
      %p519 = scmp.eq.s32.totalorder %s48, 3
      %p520 = por %p518, %p519
      %p521 = scmp.ne.s32.totalorder %s510, %s511
      %p522 = scmp.eq.s32.totalorder %s48, 0
      %p523 = por %p521, %p522
      %p524 = scmp.ne.s32.totalorder %s510, %s511
      %p525 = scmp.eq.s32.totalorder %s49, 3
      %p526 = por %p524, %p525
      %p528 = scmp.ne.s32.totalorder %s511, %s527
      %p529 = scmp.eq.s32.totalorder %s49, 0
      %p530 = por %p528, %p529
      %s531 = ssub.s32 %s51, %s58
      %p532 = scmp.eq.s32.totalorder %s531, 0
      %s534 = sadd.s32 %s533, 1
      %s535 = scalar_select %p532, %s533, %s534
      %p538 = pneg %p532
      %p539 = scmp.eq.s32.totalorder %s43, 3
      %p540 = por %p538, %p539
      %p541 = scmp.ne.s32.totalorder %s533, %s536
      %p542 = scmp.eq.s32.totalorder %s43, 0
      %p543 = por %p541, %p542
      %p544 = scmp.ne.s32.totalorder %s533, %s536
      %p545 = scmp.eq.s32.totalorder %s48, 3
      %p546 = por %p544, %p545
      %p547 = scmp.ne.s32.totalorder %s536, %s537
      %p548 = scmp.eq.s32.totalorder %s48, 0
      %p549 = por %p547, %p548
      %p550 = scmp.ne.s32.totalorder %s536, %s537
      %p551 = scmp.eq.s32.totalorder %s49, 3
      %p552 = por %p550, %p551
      %p554 = scmp.ne.s32.totalorder %s537, %s553
      %p555 = scmp.eq.s32.totalorder %s49, 0
      %p556 = por %p554, %p555
      %s557 = ssub.s32 %s50, %s62
      %p558 = scmp.eq.s32.totalorder %s557, 0
      %s560 = sadd.s32 %s559, 1
      %s561 = scalar_select %p558, %s559, %s560
      %p564 = pneg %p558
      %p565 = scmp.eq.s32.totalorder %s43, 3
      %p566 = por %p564, %p565
      %p567 = scmp.ne.s32.totalorder %s559, %s562
      %p568 = scmp.eq.s32.totalorder %s43, 0
      %p569 = por %p567, %p568
      %p570 = scmp.ne.s32.totalorder %s559, %s562
      %p571 = scmp.eq.s32.totalorder %s48, 3
      %p572 = por %p570, %p571
      %p573 = scmp.ne.s32.totalorder %s562, %s563
      %p574 = scmp.eq.s32.totalorder %s48, 0
      %p575 = por %p573, %p574
      %p576 = scmp.ne.s32.totalorder %s562, %s563
      %p577 = scmp.eq.s32.totalorder %s49, 3
      %p578 = por %p576, %p577
      %p580 = scmp.ne.s32.totalorder %s563, %s579
      %p581 = scmp.eq.s32.totalorder %s49, 0
      %p582 = por %p580, %p581
      %p583 = scmp.le.s32.totalorder 1, %s43
      %p584 = scmp.lt.s32.totalorder %s43, 5
      %p585 = pnand %p583, %p584
      %p586 = pneg %p585
      // Predicated region
      $region9: #{tpu_custom_call.1} parent=5 // pred_check
        _
      $region10: #{tpu_custom_call.1} parent=5 // pred_check_branch
        %588 = sbr.rel (%p585) target = $region12
      $region11: #{tpu_custom_call.1} parent=5 // pred_region
        %s589 = ssub.s32 %s43, 1
      $region12: #{tpu_custom_call.1} parent=5 // pred_fallthru
        _
      %p590 = scmp.lt.s32.totalorder %s43, 4
      // Predicated region
      $region13: #{tpu_custom_call.1} parent=5 // pred_check
        %p591 = pneg %p590
      $region14: #{tpu_custom_call.1} parent=5 // pred_check_branch
        %593 = sbr.rel (%p591) target = $region16
      $region15: #{tpu_custom_call.1} parent=5 // pred_region
        // Predicated region
        $region17: #{tpu_custom_call.1} parent=15 // pred_check
          %p594 = pneg %p75
        $region18: #{tpu_custom_call.1} parent=15 // pred_check_branch
          %596 = sbr.rel (%p594) target = $region20
        $region19: #{tpu_custom_call.1} parent=15 // pred_region
          %p597 = scmp.lt.s32.totalorder %s50, 1
          %s598 = scalar_select %p597, %s50, 1
          %s599 = smul.addr %s598, 2
          %s600 = smul.addr %s599, 8
          %s601 = scalar_lea.vmem %s0, %s600
        $region20: #{tpu_custom_call.1} parent=15 // pred_fallthru
          _
        // Predicated region
        $region21: #{tpu_custom_call.1} parent=15 // pred_check
          %p602 = pneg %p101
        $region22: #{tpu_custom_call.1} parent=15 // pred_check_branch
          %604 = sbr.rel (%p602) target = $region24
        $region23: #{tpu_custom_call.1} parent=15 // pred_region
          %p605 = scmp.lt.s32.totalorder %s50, 1
          %s606 = scalar_select %p605, %s50, 1
          %s607 = smul.addr %s606, 2
          %s608 = smul.addr %s607, 8
          %s609 = scalar_lea.vmem %s1, %s608
        $region24: #{tpu_custom_call.1} parent=15 // pred_fallthru
          _
        // Predicated region
        $region25: #{tpu_custom_call.1} parent=15 // pred_check
          %p610 = pneg %p127
        $region26: #{tpu_custom_call.1} parent=15 // pred_check_branch
          %612 = sbr.rel (%p610) target = $region28
        $region27: #{tpu_custom_call.1} parent=15 // pred_region
          %p613 = scmp.lt.s32.totalorder %s50, 1
          %s614 = scalar_select %p613, %s50, 1
          %s615 = scalar_lea.vmem %s2, %s614
        $region28: #{tpu_custom_call.1} parent=15 // pred_fallthru
          _
        // Predicated region
        $region29: #{tpu_custom_call.1} parent=15 // pred_check
          %p616 = pneg %p153
        $region30: #{tpu_custom_call.1} parent=15 // pred_check_branch
          %618 = sbr.rel (%p616) target = $region32
        $region31: #{tpu_custom_call.1} parent=15 // pred_region
          %s619 = sand.u32 %s143, 1
          %s620 = scalar_lea.sflag [#allocation4], %s619
          %s621 = sand.u32 %s143, 1
          %s622 = smul.addr %s621, 64
          %s623 = scalar_lea.vmem [#allocation3], %s622
          %625 = vsyncadd %s620, 0
          %s626 = smul.addr %s51, 16
          %s627 = smul.addr %s626, 4
          %s628 = scalar_lea.hbm %s3, %s627
          %s629 = sshll.u32 %s628, 4
          %s630 = int_to_ptr.hbm [resolvable:$true] %s629
          %s631 = sshll.u32 %s623, 4
          %s632 = int_to_ptr.vmem [resolvable:$true] %s631
          %637 = dma.hbm_to_vmem [thread:$0]  %s630, 1024, %s632, %s620, 64, 64, 4
        $region32: #{tpu_custom_call.1} parent=15 // pred_fallthru
          _
        // Predicated region
        $region33: #{tpu_custom_call.1} parent=15 // pred_check
          %p638 = pneg %p179
        $region34: #{tpu_custom_call.1} parent=15 // pred_check_branch
          %640 = sbr.rel (%p638) target = $region36
        $region35: #{tpu_custom_call.1} parent=15 // pred_region
          %p641 = scmp.lt.s32.totalorder %s51, 1
          %s642 = scalar_select %p641, %s51, 1
          %s643 = scalar_lea.vmem %s4, %s642
        $region36: #{tpu_custom_call.1} parent=15 // pred_fallthru
          _
        // Predicated region
        $region37: #{tpu_custom_call.1} parent=15 // pred_check
          %p644 = pneg %p205
        $region38: #{tpu_custom_call.1} parent=15 // pred_check_branch
          %646 = sbr.rel (%p644) target = $region40
        $region39: #{tpu_custom_call.1} parent=15 // pred_region
          %s647 = sand.u32 %s43, 1
          %s648 = scalar_lea.sflag [#allocation7], %s647
          %s649 = sand.u32 %s195, 1
          %s650 = smul.addr %s649, 64
          %s651 = scalar_lea.vmem [#allocation6], %s650
          %653 = vsyncadd %s648, 0
          %s654 = smul.addr %s51, 16
          %s655 = smul.addr %s654, 4
          %s656 = scalar_lea.hbm %s5, %s655
          %s657 = sshll.u32 %s656, 4
          %s658 = int_to_ptr.hbm [resolvable:$true] %s657
          %s659 = sshll.u32 %s651, 4
          %s660 = int_to_ptr.vmem [resolvable:$true] %s659
          %665 = dma.hbm_to_vmem [thread:$0]  %s658, 1024, %s660, %s648, 64, 64, 4
        $region40: #{tpu_custom_call.1} parent=15 // pred_fallthru
          _
        // Predicated region
        $region41: #{tpu_custom_call.1} parent=15 // pred_check
          %p666 = pneg %p231
        $region42: #{tpu_custom_call.1} parent=15 // pred_check_branch
          %668 = sbr.rel (%p666) target = $region44
        $region43: #{tpu_custom_call.1} parent=15 // pred_region
          %p669 = scmp.lt.s32.totalorder %s51, 1
          %s670 = scalar_select %p669, %s51, 1
          %s671 = scalar_lea.vmem %s6, %s670
        $region44: #{tpu_custom_call.1} parent=15 // pred_fallthru
          _
        // Predicated region
        $region45: #{tpu_custom_call.1} parent=15 // pred_check
          %p672 = pneg %p257
        $region46: #{tpu_custom_call.1} parent=15 // pred_check_branch
          %674 = sbr.rel (%p672) target = $region48
        $region47: #{tpu_custom_call.1} parent=15 // pred_region
          %s675 = sand.u32 %s43, 1
          %s676 = scalar_lea.sflag [#allocation7], %s675
          %s677 = sand.u32 %s247, 1
          %s678 = smul.addr %s677, 64
          %s679 = scalar_lea.vmem [#allocation8], %s678
          %681 = vsyncadd %s676, 0
          %s682 = smul.addr %s51, 16
          %s683 = smul.addr %s682, 4
          %s684 = scalar_lea.hbm %s7, %s683
          %s685 = sshll.u32 %s684, 4
          %s686 = int_to_ptr.hbm [resolvable:$true] %s685
          %s687 = sshll.u32 %s679, 4
          %s688 = int_to_ptr.vmem [resolvable:$true] %s687
          %693 = dma.hbm_to_vmem [thread:$0]  %s686, 1024, %s688, %s676, 64, 64, 4
        $region48: #{tpu_custom_call.1} parent=15 // pred_fallthru
          _
        // Predicated region
        $region49: #{tpu_custom_call.1} parent=15 // pred_check
          %p694 = pneg %p283
        $region50: #{tpu_custom_call.1} parent=15 // pred_check_branch
          %696 = sbr.rel (%p694) target = $region52
        $region51: #{tpu_custom_call.1} parent=15 // pred_region
          %p697 = scmp.lt.s32.totalorder %s51, 1
          %s698 = scalar_select %p697, %s51, 1
          %s699 = scalar_lea.vmem %s8, %s698
        $region52: #{tpu_custom_call.1} parent=15 // pred_fallthru
          _
        // Predicated region
        $region53: #{tpu_custom_call.1} parent=15 // pred_check
          %p700 = pneg %p309
        $region54: #{tpu_custom_call.1} parent=15 // pred_check_branch
          %702 = sbr.rel (%p700) target = $region56
        $region55: #{tpu_custom_call.1} parent=15 // pred_region
          %s703 = sand.u32 %s43, 1
          %s704 = scalar_lea.sflag [#allocation10], %s703
          %s705 = sand.u32 %s299, 1
          %s706 = smul.addr %s705, 64
          %s707 = scalar_lea.vmem [#allocation9], %s706
          %709 = vsyncadd %s704, 0
          %s710 = smul.addr %s51, 16
          %s711 = smul.addr %s710, 4
          %s712 = scalar_lea.hbm %s9, %s711
          %s713 = sshll.u32 %s712, 4
          %s714 = int_to_ptr.hbm [resolvable:$true] %s713
          %s715 = sshll.u32 %s707, 4
          %s716 = int_to_ptr.vmem [resolvable:$true] %s715
          %721 = dma.hbm_to_vmem [thread:$0]  %s714, 1024, %s716, %s704, 64, 64, 4
        $region56: #{tpu_custom_call.1} parent=15 // pred_fallthru
          _
        // Predicated region
        $region57: #{tpu_custom_call.1} parent=15 // pred_check
          %p722 = pneg %p335
        $region58: #{tpu_custom_call.1} parent=15 // pred_check_branch
          %724 = sbr.rel (%p722) target = $region60
        $region59: #{tpu_custom_call.1} parent=15 // pred_region
          %p725 = scmp.lt.s32.totalorder %s51, 1
          %s726 = scalar_select %p725, %s51, 1
          %s727 = scalar_lea.vmem %s10, %s726
        $region60: #{tpu_custom_call.1} parent=15 // pred_fallthru
          _
        // Predicated region
        $region61: #{tpu_custom_call.1} parent=15 // pred_check
          %p728 = pneg %p361
        $region62: #{tpu_custom_call.1} parent=15 // pred_check_branch
          %730 = sbr.rel (%p728) target = $region64
        $region63: #{tpu_custom_call.1} parent=15 // pred_region
          %p731 = scmp.lt.s32.totalorder %s51, 1
          %s732 = scalar_select %p731, %s51, 1
          %s733 = scalar_lea.vmem %s11, %s732
        $region64: #{tpu_custom_call.1} parent=15 // pred_fallthru
          _
        // Predicated region
        $region65: #{tpu_custom_call.1} parent=15 // pred_check
          %p734 = pneg %p387
        $region66: #{tpu_custom_call.1} parent=15 // pred_check_branch
          %736 = sbr.rel (%p734) target = $region68
        $region67: #{tpu_custom_call.1} parent=15 // pred_region
          %s737 = sand.u32 %s43, 1
          %s738 = scalar_lea.sflag [#allocation10], %s737
          %s739 = sand.u32 %s377, 1
          %s740 = scalar_lea.vmem [#allocation11], %s739
          %742 = vsyncadd %s738, 0
          %s743 = scalar_lea.hbm %s12, %s51
          %s745 = sshll.u32 %s743, 4
          %s746 = int_to_ptr.hbm [resolvable:$true] %s745
          %s747 = sshll.u32 %s740, 4
          %s748 = int_to_ptr.vmem [resolvable:$true] %s747
          %750 = dma.hbm_to_vmem [thread:$0]  %s746, 16, %s748, %s738
        $region68: #{tpu_custom_call.1} parent=15 // pred_fallthru
          _
        // Predicated region
        $region69: #{tpu_custom_call.1} parent=15 // pred_check
          %p751 = pneg %p413
        $region70: #{tpu_custom_call.1} parent=15 // pred_check_branch
          %753 = sbr.rel (%p751) target = $region72
        $region71: #{tpu_custom_call.1} parent=15 // pred_region
          %s754 = sand.u32 %s43, 1
          %s755 = scalar_lea.sflag [#allocation13], %s754
          %s756 = sand.u32 %s403, 1
          %s757 = smul.addr %s756, 192
          %s758 = scalar_lea.vmem [#allocation12], %s757
          %760 = vsyncadd %s755, 0
          %s761 = smul.addr %s51, 48
          %s762 = smul.addr %s761, 4
          %s763 = scalar_lea.hbm %s13, %s762
          %s764 = sshll.u32 %s763, 4
          %s765 = int_to_ptr.hbm [resolvable:$true] %s764
          %s766 = sshll.u32 %s758, 4
          %s767 = int_to_ptr.vmem [resolvable:$true] %s766
          %772 = dma.hbm_to_vmem [thread:$0]  %s765, 3072, %s767, %s755, 64, 64, 4
        $region72: #{tpu_custom_call.1} parent=15 // pred_fallthru
          _
        // Predicated region
        $region73: #{tpu_custom_call.1} parent=15 // pred_check
          %p773 = pneg %p439
        $region74: #{tpu_custom_call.1} parent=15 // pred_check_branch
          %775 = sbr.rel (%p773) target = $region76
        $region75: #{tpu_custom_call.1} parent=15 // pred_region
          %p776 = scmp.lt.s32.totalorder %s51, 1
          %s777 = scalar_select %p776, %s51, 1
          %s778 = scalar_lea.vmem %s14, %s777
        $region76: #{tpu_custom_call.1} parent=15 // pred_fallthru
          _
        // Predicated region
        $region77: #{tpu_custom_call.1} parent=15 // pred_check
          %p779 = pneg %p465
        $region78: #{tpu_custom_call.1} parent=15 // pred_check_branch
          %781 = sbr.rel (%p779) target = $region80
        $region79: #{tpu_custom_call.1} parent=15 // pred_region
          %s782 = sand.u32 %s43, 1
          %s783 = scalar_lea.sflag [#allocation13], %s782
          %s784 = sand.u32 %s455, 1
          %s785 = smul.addr %s784, 192
          %s786 = scalar_lea.vmem [#allocation14], %s785
          %788 = vsyncadd %s783, 0
          %s789 = smul.addr %s51, 48
          %s790 = smul.addr %s789, 4
          %s791 = scalar_lea.hbm %s15, %s790
          %s792 = sshll.u32 %s791, 4
          %s793 = int_to_ptr.hbm [resolvable:$true] %s792
          %s794 = sshll.u32 %s786, 4
          %s795 = int_to_ptr.vmem [resolvable:$true] %s794
          %800 = dma.hbm_to_vmem [thread:$0]  %s793, 3072, %s795, %s783, 64, 64, 4
        $region80: #{tpu_custom_call.1} parent=15 // pred_fallthru
          _
        // Predicated region
        $region81: #{tpu_custom_call.1} parent=15 // pred_check
          %p801 = pneg %p491
        $region82: #{tpu_custom_call.1} parent=15 // pred_check_branch
          %803 = sbr.rel (%p801) target = $region84
        $region83: #{tpu_custom_call.1} parent=15 // pred_region
          %p804 = scmp.lt.s32.totalorder %s51, 1
          %s805 = scalar_select %p804, %s51, 1
          %s806 = scalar_lea.vmem %s16, %s805
        $region84: #{tpu_custom_call.1} parent=15 // pred_fallthru
          _
        // Predicated region
        $region85: #{tpu_custom_call.1} parent=15 // pred_check
          %p807 = pneg %p517
        $region86: #{tpu_custom_call.1} parent=15 // pred_check_branch
          %809 = sbr.rel (%p807) target = $region88
        $region87: #{tpu_custom_call.1} parent=15 // pred_region
          %p810 = scmp.lt.s32.totalorder %s51, 1
          %s811 = scalar_select %p810, %s51, 1
          %s812 = scalar_lea.vmem %s17, %s811
        $region88: #{tpu_custom_call.1} parent=15 // pred_fallthru
          _
        // Predicated region
        $region89: #{tpu_custom_call.1} parent=15 // pred_check
          %p813 = pneg %p543
        $region90: #{tpu_custom_call.1} parent=15 // pred_check_branch
          %815 = sbr.rel (%p813) target = $region92
        $region91: #{tpu_custom_call.1} parent=15 // pred_region
          %s816 = sand.u32 %s533, 1
          %s817 = scalar_lea.sflag [#allocation16], %s816
          %s818 = sand.u32 %s533, 1
          %s819 = scalar_lea.vmem [#allocation15], %s818
          %821 = vsyncadd %s817, 0
          %s822 = scalar_lea.hbm %s18, %s51
          %s824 = sshll.u32 %s822, 4
          %s825 = int_to_ptr.hbm [resolvable:$true] %s824
          %s826 = sshll.u32 %s819, 4
          %s827 = int_to_ptr.vmem [resolvable:$true] %s826
          %829 = dma.hbm_to_vmem [thread:$0]  %s825, 16, %s827, %s817
        $region92: #{tpu_custom_call.1} parent=15 // pred_fallthru
          _
      $region16: #{tpu_custom_call.1} parent=5 // pred_fallthru
        _
      %p830 = scmp.le.s32.totalorder 1, %s43
      %p831 = scmp.lt.s32.totalorder %s43, 5
      %p832 = pnand %p830, %p831
      %p833 = pneg %p832
      // Predicated region
      $region93: #{tpu_custom_call.1} parent=5 // pred_check
        _
      $region94: #{tpu_custom_call.1} parent=5 // pred_check_branch
        %835 = sbr.rel (%p832) target = $region96
      $region95: #{tpu_custom_call.1} parent=5 // pred_region
        %s836 = ssub.s32 %s43, 1
        %s837 = sand.u32 %s146, 1
        %s838 = scalar_lea.sflag [#allocation4], %s837
        %s839 = sand.u32 %s146, 1
        %s840 = smul.addr %s839, 64
        %s841 = scalar_lea.vmem [#allocation3], %s840
        // Predicated region
        $region97: #{tpu_custom_call.1} parent=95 // pred_check
          %p842 = pneg %p159
        $region98: #{tpu_custom_call.1} parent=95 // pred_check_branch
          %844 = sbr.rel (%p842) target = $region100
        $region99: #{tpu_custom_call.1} parent=95 // pred_region
          %846 = dma.done %s838, 1024
        $region100: #{tpu_custom_call.1} parent=95 // pred_fallthru
          _
        %s847 = sand.u32 %s48, 1
        %s848 = scalar_lea.sflag [#allocation7], %s847
        %s849 = sand.u32 %s198, 1
        %s850 = smul.addr %s849, 64
        %s851 = scalar_lea.vmem [#allocation6], %s850
        // Predicated region
        $region101: #{tpu_custom_call.1} parent=95 // pred_check
          %p852 = pneg %p211
        $region102: #{tpu_custom_call.1} parent=95 // pred_check_branch
          %854 = sbr.rel (%p852) target = $region104
        $region103: #{tpu_custom_call.1} parent=95 // pred_region
          %856 = dma.done %s848, 1024
        $region104: #{tpu_custom_call.1} parent=95 // pred_fallthru
          _
        %s857 = sand.u32 %s48, 1
        %s858 = scalar_lea.sflag [#allocation7], %s857
        %s859 = sand.u32 %s250, 1
        %s860 = smul.addr %s859, 64
        %s861 = scalar_lea.vmem [#allocation8], %s860
        // Predicated region
        $region105: #{tpu_custom_call.1} parent=95 // pred_check
          %p862 = pneg %p263
        $region106: #{tpu_custom_call.1} parent=95 // pred_check_branch
          %864 = sbr.rel (%p862) target = $region108
        $region107: #{tpu_custom_call.1} parent=95 // pred_region
          %866 = dma.done %s858, 1024
        $region108: #{tpu_custom_call.1} parent=95 // pred_fallthru
          _
        %s867 = sand.u32 %s48, 1
        %s868 = scalar_lea.sflag [#allocation10], %s867
        %s869 = sand.u32 %s302, 1
        %s870 = smul.addr %s869, 64
        %s871 = scalar_lea.vmem [#allocation9], %s870
        // Predicated region
        $region109: #{tpu_custom_call.1} parent=95 // pred_check
          %p872 = pneg %p315
        $region110: #{tpu_custom_call.1} parent=95 // pred_check_branch
          %874 = sbr.rel (%p872) target = $region112
        $region111: #{tpu_custom_call.1} parent=95 // pred_region
          %876 = dma.done %s868, 1024
        $region112: #{tpu_custom_call.1} parent=95 // pred_fallthru
          _
        %s877 = sand.u32 %s48, 1
        %s878 = scalar_lea.sflag [#allocation10], %s877
        %s879 = sand.u32 %s380, 1
        %s880 = scalar_lea.vmem [#allocation11], %s879
        // Predicated region
        $region113: #{tpu_custom_call.1} parent=95 // pred_check
          %p881 = pneg %p393
        $region114: #{tpu_custom_call.1} parent=95 // pred_check_branch
          %883 = sbr.rel (%p881) target = $region116
        $region115: #{tpu_custom_call.1} parent=95 // pred_region
          %885 = dma.done %s878, 16
        $region116: #{tpu_custom_call.1} parent=95 // pred_fallthru
          _
        %s886 = sand.u32 %s48, 1
        %s887 = scalar_lea.sflag [#allocation13], %s886
        %s888 = sand.u32 %s406, 1
        %s889 = smul.addr %s888, 192
        %s890 = scalar_lea.vmem [#allocation12], %s889
        // Predicated region
        $region117: #{tpu_custom_call.1} parent=95 // pred_check
          %p891 = pneg %p419
        $region118: #{tpu_custom_call.1} parent=95 // pred_check_branch
          %893 = sbr.rel (%p891) target = $region120
        $region119: #{tpu_custom_call.1} parent=95 // pred_region
          %895 = dma.done %s887, 3072
        $region120: #{tpu_custom_call.1} parent=95 // pred_fallthru
          _
        %s896 = sand.u32 %s48, 1
        %s897 = scalar_lea.sflag [#allocation13], %s896
        %s898 = sand.u32 %s458, 1
        %s899 = smul.addr %s898, 192
        %s900 = scalar_lea.vmem [#allocation14], %s899
        // Predicated region
        $region121: #{tpu_custom_call.1} parent=95 // pred_check
          %p901 = pneg %p471
        $region122: #{tpu_custom_call.1} parent=95 // pred_check_branch
          %903 = sbr.rel (%p901) target = $region124
        $region123: #{tpu_custom_call.1} parent=95 // pred_region
          %905 = dma.done %s897, 3072
        $region124: #{tpu_custom_call.1} parent=95 // pred_fallthru
          _
        %s906 = sand.u32 %s536, 1
        %s907 = scalar_lea.sflag [#allocation16], %s906
        %s908 = sand.u32 %s536, 1
        %s909 = scalar_lea.vmem [#allocation15], %s908
        // Predicated region
        $region125: #{tpu_custom_call.1} parent=95 // pred_check
          %p910 = pneg %p549
        $region126: #{tpu_custom_call.1} parent=95 // pred_check_branch
          %912 = sbr.rel (%p910) target = $region128
        $region127: #{tpu_custom_call.1} parent=95 // pred_region
          %914 = dma.done %s907, 16
        $region128: #{tpu_custom_call.1} parent=95 // pred_fallthru
          _
        %p915 = scmp.lt.s32.totalorder %s52, 1
        %s916 = scalar_select %p915, %s52, 1
        %s917 = smul.addr %s916, 2
        %s918 = smul.addr %s917, 8
        %s919 = scalar_lea.vmem %s0, %s918
        %p920 = pneg %p81
        %p921 = pneg %p78
        %p922 = scmp.lt.s32.totalorder %s52, 1
        %s923 = scalar_select %p922, %s52, 1
        %s924 = smul.addr %s923, 2
        %s925 = smul.addr %s924, 8
        %s926 = scalar_lea.vmem %s1, %s925
        %p927 = pneg %p107
        %p928 = pneg %p104
        %p929 = scmp.lt.s32.totalorder %s52, 1
        %s930 = scalar_select %p929, %s52, 1
        %s931 = scalar_lea.vmem %s2, %s930
        %p932 = pneg %p133
        %p933 = pneg %p130
        %s934 = sand.u32 %s146, 1
        %s935 = scalar_lea.sflag [#allocation4], %s934
        %s936 = sand.u32 %s146, 1
        %s937 = smul.addr %s936, 64
        %s938 = scalar_lea.vmem [#allocation3], %s937
        %p939 = pneg %p159
        %p940 = pneg %p156
        %p941 = scmp.lt.s32.totalorder %s53, 1
        %s942 = scalar_select %p941, %s53, 1
        %s943 = scalar_lea.vmem %s4, %s942
        %p944 = pneg %p185
        %p945 = pneg %p182
        %s946 = sand.u32 %s48, 1
        %s947 = scalar_lea.sflag [#allocation7], %s946
        %s948 = sand.u32 %s198, 1
        %s949 = smul.addr %s948, 64
        %s950 = scalar_lea.vmem [#allocation6], %s949
        %p951 = pneg %p211
        %p952 = pneg %p208
        %p953 = scmp.lt.s32.totalorder %s53, 1
        %s954 = scalar_select %p953, %s53, 1
        %s955 = scalar_lea.vmem %s6, %s954
        %p956 = pneg %p237
        %p957 = pneg %p234
        %s958 = sand.u32 %s48, 1
        %s959 = scalar_lea.sflag [#allocation7], %s958
        %s960 = sand.u32 %s250, 1
        %s961 = smul.addr %s960, 64
        %s962 = scalar_lea.vmem [#allocation8], %s961
        %p963 = pneg %p263
        %p964 = pneg %p260
        %p965 = scmp.lt.s32.totalorder %s53, 1
        %s966 = scalar_select %p965, %s53, 1
        %s967 = scalar_lea.vmem %s8, %s966
        %p968 = pneg %p289
        %p969 = pneg %p286
        %s970 = sand.u32 %s48, 1
        %s971 = scalar_lea.sflag [#allocation10], %s970
        %s972 = sand.u32 %s302, 1
        %s973 = smul.addr %s972, 64
        %s974 = scalar_lea.vmem [#allocation9], %s973
        %p975 = pneg %p315
        %p976 = pneg %p312
        %p977 = scmp.lt.s32.totalorder %s53, 1
        %s978 = scalar_select %p977, %s53, 1
        %s979 = scalar_lea.vmem %s10, %s978
        %p980 = pneg %p341
        %p981 = pneg %p338
        %p982 = scmp.lt.s32.totalorder %s53, 1
        %s983 = scalar_select %p982, %s53, 1
        %s984 = scalar_lea.vmem %s11, %s983
        %p985 = pneg %p367
        %p986 = pneg %p364
        %s987 = sand.u32 %s48, 1
        %s988 = scalar_lea.sflag [#allocation10], %s987
        %s989 = sand.u32 %s380, 1
        %s990 = scalar_lea.vmem [#allocation11], %s989
        %p991 = pneg %p393
        %p992 = pneg %p390
        %s993 = sand.u32 %s48, 1
        %s994 = scalar_lea.sflag [#allocation13], %s993
        %s995 = sand.u32 %s406, 1
        %s996 = smul.addr %s995, 192
        %s997 = scalar_lea.vmem [#allocation12], %s996
        %p998 = pneg %p419
        %p999 = pneg %p416
        %p1000 = scmp.lt.s32.totalorder %s53, 1
        %s1001 = scalar_select %p1000, %s53, 1
        %s1002 = scalar_lea.vmem %s14, %s1001
        %p1003 = pneg %p445
        %p1004 = pneg %p442
        %s1005 = sand.u32 %s48, 1
        %s1006 = scalar_lea.sflag [#allocation13], %s1005
        %s1007 = sand.u32 %s458, 1
        %s1008 = smul.addr %s1007, 192
        %s1009 = scalar_lea.vmem [#allocation14], %s1008
        %p1010 = pneg %p471
        %p1011 = pneg %p468
        %p1012 = scmp.lt.s32.totalorder %s53, 1
        %s1013 = scalar_select %p1012, %s53, 1
        %s1014 = scalar_lea.vmem %s16, %s1013
        %p1015 = pneg %p497
        %p1016 = pneg %p494
        %p1017 = scmp.lt.s32.totalorder %s53, 1
        %s1018 = scalar_select %p1017, %s53, 1
        %s1019 = scalar_lea.vmem %s17, %s1018
        %p1020 = pneg %p523
        %p1021 = pneg %p520
        %s1022 = sand.u32 %s536, 1
        %s1023 = scalar_lea.sflag [#allocation16], %s1022
        %s1024 = sand.u32 %s536, 1
        %s1025 = scalar_lea.vmem [#allocation15], %s1024
        %p1026 = pneg %p549
        %p1027 = pneg %p546
        %p1028 = pneg %p575
        %p1029 = pneg %p572
        %s1030 = sand.u32 %s562, 1
        %s1031 = scalar_lea.sflag [#allocation5], %s1030
        %s1032 = sand.u32 %s562, 1
        %s1033 = smul.addr %s1032, 16
        %s1034 = scalar_lea.vmem [#allocation17], %s1033
        %p1035 = scmp.lt.s32.totalorder %s52, 1
        %s1036 = scalar_select %p1035, %s52, 1
        %s1037 = smul.addr %s1036, 2
        %s1038 = smul.addr %s1037, 8
        %s1039 = scalar_lea.vmem %s0, %s1038
        %p1040 = scmp.lt.s32.totalorder %s52, 1
        %s1041 = scalar_select %p1040, %s52, 1
        %s1042 = smul.addr %s1041, 2
        %s1043 = smul.addr %s1042, 8
        %s1044 = scalar_lea.vmem %s1, %s1043
        %p1045 = scmp.lt.s32.totalorder %s52, 1
        %s1046 = scalar_select %p1045, %s52, 1
        %s1047 = scalar_lea.vmem %s2, %s1046
        %p1048 = scmp.lt.s32.totalorder %s53, 1
        %s1049 = scalar_select %p1048, %s53, 1
        %s1050 = scalar_lea.vmem %s4, %s1049
        %p1051 = scmp.lt.s32.totalorder %s53, 1
        %s1052 = scalar_select %p1051, %s53, 1
        %s1053 = scalar_lea.vmem %s6, %s1052
        %p1054 = scmp.lt.s32.totalorder %s53, 1
        %s1055 = scalar_select %p1054, %s53, 1
        %s1056 = scalar_lea.vmem %s8, %s1055
        %p1057 = scmp.lt.s32.totalorder %s53, 1
        %s1058 = scalar_select %p1057, %s53, 1
        %s1059 = scalar_lea.vmem %s10, %s1058
        %p1060 = scmp.lt.s32.totalorder %s53, 1
        %s1061 = scalar_select %p1060, %s53, 1
        %s1062 = scalar_lea.vmem %s11, %s1061
        %p1063 = scmp.lt.s32.totalorder %s53, 1
        %s1064 = scalar_select %p1063, %s53, 1
        %s1065 = scalar_lea.vmem %s14, %s1064
        %p1066 = scmp.lt.s32.totalorder %s53, 1
        %s1067 = scalar_select %p1066, %s53, 1
        %s1068 = scalar_lea.vmem %s16, %s1067
        %p1069 = scmp.lt.s32.totalorder %s53, 1
        %s1070 = scalar_select %p1069, %s53, 1
        %s1071 = scalar_lea.vmem %s17, %s1070
        %p1073 = scmp.eq.s32.totalorder %s53, 0
        // Predicated region
        $region129: #{tpu_custom_call.1} parent=95 // pred_check
          %p1074 = pneg %p1073
        $region130: #{tpu_custom_call.1} parent=95 // pred_check_branch
          %1076 = sbr.rel (%p1074) target = $region132
        $region131: #{tpu_custom_call.1} parent=95 // pred_region
          %v1077 = vld [vmem:[%s1039] sm:$0xff]
          %v1078 = vld [vmem:[%s1039 + $0x8] sm:$0xff]
          %1079 = vst [vmem:[#allocation2] sm:$0xff] %v1077
          %1080 = vst [vmem:[#allocation2 + $0x8] sm:$0xff] %v1078
        $region132: #{tpu_custom_call.1} parent=95 // pred_fallthru
          _
        %v1081 = vld [vmem:[#allocation2] sm:$0xff]
        %v1082 = vld [vmem:[#allocation2 + $0x8] sm:$0xff]
        %v1083 = vld [vmem:[%s1044] sm:$0xff]
        %v1084 = vld [vmem:[%s1044 + $0x8] sm:$0xff]
        %v1085 = vld [vmem:[%s1047] sm:$0x1]
        %1087 = vset.pattern.permute.xlu0 0
        %1088 = vperm.xlu0 %1087, %v1083
        %v1089 = vpop.permute.xlu0 %1088
        %1092 = vset.pattern.permute.xlu0 0
        %1093 = vperm.xlu0 %1092, %v1084
        %v1094 = vpop.permute.xlu0 %1093
        %v1097 = vperm.slane %v1085, 0
        %v1099 = vmul.f32 %v1089, %v1097
        %v1100 = vmul.f32 %v1094, %v1097
        %v1101 = vpack.c.bf16 %v1082, %v1081
        %v1102 = vld [vmem:[%s841] sm:$0xf]
        %v1103 = vld [vmem:[%s841 + $0x4] sm:$0xf]
        %v1104 = vld [vmem:[%s841 + $0x8] sm:$0xf]
        %v1105 = vld [vmem:[%s841 + $0xc] sm:$0xf]
        %v1106 = vld [vmem:[%s841 + $0x10] sm:$0xf]
        %v1107 = vld [vmem:[%s841 + $0x14] sm:$0xf]
        %v1108 = vld [vmem:[%s841 + $0x18] sm:$0xf]
        %v1109 = vld [vmem:[%s841 + $0x1c] sm:$0xf]
        %v1110 = vld [vmem:[%s841 + $0x20] sm:$0xf]
        %v1111 = vld [vmem:[%s841 + $0x24] sm:$0xf]
        %v1112 = vld [vmem:[%s841 + $0x28] sm:$0xf]
        %v1113 = vld [vmem:[%s841 + $0x2c] sm:$0xf]
        %v1114 = vld [vmem:[%s841 + $0x30] sm:$0xf]
        %v1115 = vld [vmem:[%s841 + $0x34] sm:$0xf]
        %v1116 = vld [vmem:[%s841 + $0x38] sm:$0xf]
        %v1117 = vld [vmem:[%s841 + $0x3c] sm:$0xf]
        %v1118 = vld [vmem:[%s1050] sm:$0x1]
        %v1120 = vperm.slane %v1118, 0
        %v1138 = vunpack.c.l.b16 %v1102
        %v1139 = vunpack.c.l.b16 %v1103
        %v1140 = vunpack.c.l.b16 %v1104
        %v1141 = vunpack.c.l.b16 %v1105
        %v1142 = vunpack.c.l.b16 %v1106
        %v1143 = vunpack.c.l.b16 %v1107
        %v1144 = vunpack.c.l.b16 %v1108
        %v1145 = vunpack.c.l.b16 %v1109
        %v1146 = vunpack.c.l.b16 %v1110
        %v1147 = vunpack.c.l.b16 %v1111
        %v1148 = vunpack.c.l.b16 %v1112
        %v1149 = vunpack.c.l.b16 %v1113
        %v1150 = vunpack.c.l.b16 %v1114
        %v1151 = vunpack.c.l.b16 %v1115
        %v1152 = vunpack.c.l.b16 %v1116
        %v1153 = vunpack.c.l.b16 %v1117
        %v1154 = vpack.c.b16 %v1139, %v1138
        %v1155 = vpack.c.b16 %v1141, %v1140
        %v1156 = vpack.c.b16 %v1143, %v1142
        %v1157 = vpack.c.b16 %v1145, %v1144
        %v1158 = vpack.c.b16 %v1147, %v1146
        %v1159 = vpack.c.b16 %v1149, %v1148
        %v1160 = vpack.c.b16 %v1151, %v1150
        %v1161 = vpack.c.b16 %v1153, %v1152
        %1170 = vmatpush.bf16.msra.mxu0 %v1161
        %1171 = vmatpush.bf16.msra.mxu0 %v1160
        %1172 = vmatpush.bf16.msra.mxu0 %v1159
        %1173 = vmatpush.bf16.msra.mxu0 %v1158
        %1174 = vmatpush.bf16.msra.mxu0 %v1157
        %1175 = vmatpush.bf16.msra.mxu0 %v1156
        %1176 = vmatpush.bf16.msra.mxu0 %v1155
        %1177 = vmatpush.bf16.msra.mxu0 %v1154
        %1178 = vmatmul.bf16.gmra.mxu0 %v1101
        %v1179 = vpop.f32.mrf.mxu0
        %v1180 = vadd.f32 %v1120, %v1179
        %v1181 = vpop.f32.mrf.mxu0
        %v1182 = vadd.f32 %v1120, %v1181
        %1183 = vdwg.mxu0
        %v1184 = vld [vmem:[%s851] sm:$0xf]
        %v1185 = vld [vmem:[%s851 + $0x4] sm:$0xf]
        %v1186 = vld [vmem:[%s851 + $0x8] sm:$0xf]
        %v1187 = vld [vmem:[%s851 + $0xc] sm:$0xf]
        %v1188 = vld [vmem:[%s851 + $0x10] sm:$0xf]
        %v1189 = vld [vmem:[%s851 + $0x14] sm:$0xf]
        %v1190 = vld [vmem:[%s851 + $0x18] sm:$0xf]
        %v1191 = vld [vmem:[%s851 + $0x1c] sm:$0xf]
        %v1192 = vld [vmem:[%s851 + $0x20] sm:$0xf]
        %v1193 = vld [vmem:[%s851 + $0x24] sm:$0xf]
        %v1194 = vld [vmem:[%s851 + $0x28] sm:$0xf]
        %v1195 = vld [vmem:[%s851 + $0x2c] sm:$0xf]
        %v1196 = vld [vmem:[%s851 + $0x30] sm:$0xf]
        %v1197 = vld [vmem:[%s851 + $0x34] sm:$0xf]
        %v1198 = vld [vmem:[%s851 + $0x38] sm:$0xf]
        %v1199 = vld [vmem:[%s851 + $0x3c] sm:$0xf]
        %v1200 = vld [vmem:[%s1053] sm:$0x1]
        %v1202 = vperm.slane %v1200, 0
        %v1220 = vunpack.c.l.b16 %v1184
        %v1221 = vunpack.c.l.b16 %v1185
        %v1222 = vunpack.c.l.b16 %v1186
        %v1223 = vunpack.c.l.b16 %v1187
        %v1224 = vunpack.c.l.b16 %v1188
        %v1225 = vunpack.c.l.b16 %v1189
        %v1226 = vunpack.c.l.b16 %v1190
        %v1227 = vunpack.c.l.b16 %v1191
        %v1228 = vunpack.c.l.b16 %v1192
        %v1229 = vunpack.c.l.b16 %v1193
        %v1230 = vunpack.c.l.b16 %v1194
        %v1231 = vunpack.c.l.b16 %v1195
        %v1232 = vunpack.c.l.b16 %v1196
        %v1233 = vunpack.c.l.b16 %v1197
        %v1234 = vunpack.c.l.b16 %v1198
        %v1235 = vunpack.c.l.b16 %v1199
        %v1236 = vpack.c.b16 %v1221, %v1220
        %v1237 = vpack.c.b16 %v1223, %v1222
        %v1238 = vpack.c.b16 %v1225, %v1224
        %v1239 = vpack.c.b16 %v1227, %v1226
        %v1240 = vpack.c.b16 %v1229, %v1228
        %v1241 = vpack.c.b16 %v1231, %v1230
        %v1242 = vpack.c.b16 %v1233, %v1232
        %v1243 = vpack.c.b16 %v1235, %v1234
        %1252 = vmatpush.bf16.msra.mxu0 %v1243
        %1253 = vmatpush.bf16.msra.mxu0 %v1242
        %1254 = vmatpush.bf16.msra.mxu0 %v1241
        %1255 = vmatpush.bf16.msra.mxu0 %v1240
        %1256 = vmatpush.bf16.msra.mxu0 %v1239
        %1257 = vmatpush.bf16.msra.mxu0 %v1238
        %1258 = vmatpush.bf16.msra.mxu0 %v1237
        %1259 = vmatpush.bf16.msra.mxu0 %v1236
        %1260 = vmatmul.bf16.gmra.mxu0 %v1101
        %v1261 = vpop.f32.mrf.mxu0
        %v1262 = vadd.f32 %v1202, %v1261
        %v1263 = vpop.f32.mrf.mxu0
        %v1264 = vadd.f32 %v1202, %v1263
        %1265 = vdwg.mxu0
        %v1266 = vld [vmem:[%s861] sm:$0xf]
        %v1267 = vld [vmem:[%s861 + $0x4] sm:$0xf]
        %v1268 = vld [vmem:[%s861 + $0x8] sm:$0xf]
        %v1269 = vld [vmem:[%s861 + $0xc] sm:$0xf]
        %v1270 = vld [vmem:[%s861 + $0x10] sm:$0xf]
        %v1271 = vld [vmem:[%s861 + $0x14] sm:$0xf]
        %v1272 = vld [vmem:[%s861 + $0x18] sm:$0xf]
        %v1273 = vld [vmem:[%s861 + $0x1c] sm:$0xf]
        %v1274 = vld [vmem:[%s861 + $0x20] sm:$0xf]
        %v1275 = vld [vmem:[%s861 + $0x24] sm:$0xf]
        %v1276 = vld [vmem:[%s861 + $0x28] sm:$0xf]
        %v1277 = vld [vmem:[%s861 + $0x2c] sm:$0xf]
        %v1278 = vld [vmem:[%s861 + $0x30] sm:$0xf]
        %v1279 = vld [vmem:[%s861 + $0x34] sm:$0xf]
        %v1280 = vld [vmem:[%s861 + $0x38] sm:$0xf]
        %v1281 = vld [vmem:[%s861 + $0x3c] sm:$0xf]
        %v1282 = vld [vmem:[%s1056] sm:$0x1]
        %v1284 = vperm.slane %v1282, 0
        %v1302 = vunpack.c.l.b16 %v1266
        %v1303 = vunpack.c.l.b16 %v1267
        %v1304 = vunpack.c.l.b16 %v1268
        %v1305 = vunpack.c.l.b16 %v1269
        %v1306 = vunpack.c.l.b16 %v1270
        %v1307 = vunpack.c.l.b16 %v1271
        %v1308 = vunpack.c.l.b16 %v1272
        %v1309 = vunpack.c.l.b16 %v1273
        %v1310 = vunpack.c.l.b16 %v1274
        %v1311 = vunpack.c.l.b16 %v1275
        %v1312 = vunpack.c.l.b16 %v1276
        %v1313 = vunpack.c.l.b16 %v1277
        %v1314 = vunpack.c.l.b16 %v1278
        %v1315 = vunpack.c.l.b16 %v1279
        %v1316 = vunpack.c.l.b16 %v1280
        %v1317 = vunpack.c.l.b16 %v1281
        %v1318 = vpack.c.b16 %v1303, %v1302
        %v1319 = vpack.c.b16 %v1305, %v1304
        %v1320 = vpack.c.b16 %v1307, %v1306
        %v1321 = vpack.c.b16 %v1309, %v1308
        %v1322 = vpack.c.b16 %v1311, %v1310
        %v1323 = vpack.c.b16 %v1313, %v1312
        %v1324 = vpack.c.b16 %v1315, %v1314
        %v1325 = vpack.c.b16 %v1317, %v1316
        %1334 = vmatpush.bf16.msra.mxu0 %v1325
        %1335 = vmatpush.bf16.msra.mxu0 %v1324
        %1336 = vmatpush.bf16.msra.mxu0 %v1323
        %1337 = vmatpush.bf16.msra.mxu0 %v1322
        %1338 = vmatpush.bf16.msra.mxu0 %v1321
        %1339 = vmatpush.bf16.msra.mxu0 %v1320
        %1340 = vmatpush.bf16.msra.mxu0 %v1319
        %1341 = vmatpush.bf16.msra.mxu0 %v1318
        %1342 = vmatmul.bf16.gmra.mxu0 %v1101
        %v1343 = vpop.f32.mrf.mxu0
        %v1344 = vadd.f32 %v1284, %v1343
        %v1345 = vpop.f32.mrf.mxu0
        %v1346 = vadd.f32 %v1284, %v1345
        %1347 = vdwg.mxu0
        %v1348 = vld [vmem:[%s871] sm:$0xf]
        %v1349 = vld [vmem:[%s871 + $0x4] sm:$0xf]
        %v1350 = vld [vmem:[%s871 + $0x8] sm:$0xf]
        %v1351 = vld [vmem:[%s871 + $0xc] sm:$0xf]
        %v1352 = vpack.c.bf16 %v1182, %v1180
        %v1353 = vpack.c.bf16 %v1264, %v1262
        %v1354 = vpack.c.bf16 %v1346, %v1344
        %vm1355 = vcmask 130048
        %v1357 = vsel %vm1355, %v1352, 0
        %v1360 = vsel %vm1355, %v1353, 0
        %1362 = vmatpush.bf16.xpose.msra.mxu0 0
        %1363 = vmatpush.bf16.xpose.msra.mxu0 0
        %1364 = vmatpush.bf16.xpose.msra.mxu0 0
        %1365 = vmatpush.bf16.xpose.msra.mxu0 0
        %1366 = vmatpush.bf16.xpose.msra.mxu0 0
        %1367 = vmatpush.bf16.xpose.msra.mxu0 0
        %1368 = vmatpush.bf16.xpose.msra.mxu0 0
        %1369 = vmatpush.bf16.xpose.msra.mxu0 %v1360
        %1370 = vmatmul.bf16.gmra.mxu0 %v1357
        %v1371 = vpop.f32.mrf.mxu0
        %v1372 = vadd.f32 0.0, %v1371
        %v1373 = vpop.f32.mrf.mxu0
        %v1374 = vadd.f32 0.0, %v1373
        %1375 = vdwg.mxu0
        %vm1376 = vcmp.gt.f32.partialorder %v1099, 0.0
        %vm1377 = vcmp.gt.f32.partialorder %v1100, 0.0
        %v1378 = vsel %vm1376, %v1372, -10000.0
        %v1379 = vsel %vm1377, %v1374, -10000.0
        %v1380 = vsel %vm1355, %v1378, -inf
        %1381 = vmax.xlane.f32.xlu0 %v1380
        %v1382 = vpop.xlane.xlu0 %1381
        %v1383 = vsel %vm1355, %v1379, -inf
        %1384 = vmax.xlane.f32.xlu0 %v1383
        %v1385 = vpop.xlane.xlu0 %1384
        %v1386 = vsub.f32 %v1378, %v1382
        %v1387 = vsub.f32 %v1379, %v1385
        %v1388 = vmul.f32 %v1386, 1.442695
        %v1389 = vpow.pop %v1388
        %v1390 = vmul.f32 %v1387, 1.442695
        %v1391 = vpow.pop %v1390
        %v1392 = vsel %vm1355, %v1389, 0.0
        %1393 = vadd.xlane.f32.xlu0 %v1392
        %v1394 = vpop.xlane.xlu0 %1393
        %v1395 = vsel %vm1355, %v1391, 0.0
        %1396 = vadd.xlane.f32.xlu0 %v1395
        %v1397 = vpop.xlane.xlu0 %1396
        %v1398 = vrcp.pop %v1394
        %v1399 = vrcp.pop %v1397
        %v1400 = vmul.f32 %v1389, %v1398
        %v1401 = vmul.f32 %v1391, %v1399
        %v1402 = vpack.c.bf16 %v1401, %v1400
        %v1404 = vsel %vm1355, %v1402, 0
        %1406 = vmatpush.bf16.msra.mxu0 0
        %1407 = vmatpush.bf16.msra.mxu0 0
        %1408 = vmatpush.bf16.msra.mxu0 0
        %1409 = vmatpush.bf16.msra.mxu0 0
        %1410 = vmatpush.bf16.msra.mxu0 0
        %1411 = vmatpush.bf16.msra.mxu0 0
        %1412 = vmatpush.bf16.msra.mxu0 0
        %1413 = vmatpush.bf16.msra.mxu0 %v1354
        %1414 = vmatmul.bf16.gmra.mxu0 %v1404
        %v1415 = vpop.f32.mrf.mxu0
        %v1416 = vadd.f32 0.0, %v1415
        %v1417 = vpop.f32.mrf.mxu0
        %v1418 = vadd.f32 0.0, %v1417
        %1419 = vdwg.mxu0
        %v1420 = vpack.c.bf16 %v1418, %v1416
        %1422 = vrot.lane.b32.xlu0 %v1352, 112
        %v1423 = vpop.permute.xlu0 %1422
        %1425 = vrot.lane.b32.xlu0 %v1353, 112
        %v1426 = vpop.permute.xlu0 %1425
        %v1428 = vsel %vm1355, %v1423, 0
        %v1431 = vsel %vm1355, %v1426, 0
        %1433 = vmatpush.bf16.xpose.msra.mxu0 0
        %1434 = vmatpush.bf16.xpose.msra.mxu0 0
        %1435 = vmatpush.bf16.xpose.msra.mxu0 0
        %1436 = vmatpush.bf16.xpose.msra.mxu0 0
        %1437 = vmatpush.bf16.xpose.msra.mxu0 0
        %1438 = vmatpush.bf16.xpose.msra.mxu0 0
        %1439 = vmatpush.bf16.xpose.msra.mxu0 0
        %1440 = vmatpush.bf16.xpose.msra.mxu0 %v1431
        %1441 = vmatmul.bf16.gmra.mxu0 %v1428
        %v1442 = vpop.f32.mrf.mxu0
        %v1443 = vadd.f32 0.0, %v1442
        %v1444 = vpop.f32.mrf.mxu0
        %v1445 = vadd.f32 0.0, %v1444
        %1446 = vdwg.mxu0
        %v1447 = vsel %vm1376, %v1443, -10000.0
        %v1448 = vsel %vm1377, %v1445, -10000.0
        %v1449 = vsel %vm1355, %v1447, -inf
        %1450 = vmax.xlane.f32.xlu0 %v1449
        %v1451 = vpop.xlane.xlu0 %1450
        %v1452 = vsel %vm1355, %v1448, -inf
        %1453 = vmax.xlane.f32.xlu0 %v1452
        %v1454 = vpop.xlane.xlu0 %1453
        %v1455 = vsub.f32 %v1447, %v1451
        %v1456 = vsub.f32 %v1448, %v1454
        %v1457 = vmul.f32 %v1455, 1.442695
        %v1458 = vpow.pop %v1457
        %v1459 = vmul.f32 %v1456, 1.442695
        %v1460 = vpow.pop %v1459
        %v1461 = vsel %vm1355, %v1458, 0.0
        %1462 = vadd.xlane.f32.xlu0 %v1461
        %v1463 = vpop.xlane.xlu0 %1462
        %v1464 = vsel %vm1355, %v1460, 0.0
        %1465 = vadd.xlane.f32.xlu0 %v1464
        %v1466 = vpop.xlane.xlu0 %1465
        %v1467 = vrcp.pop %v1463
        %v1468 = vrcp.pop %v1466
        %v1469 = vmul.f32 %v1458, %v1467
        %v1470 = vmul.f32 %v1460, %v1468
        %v1471 = vpack.c.bf16 %v1470, %v1469
        %1473 = vrot.lane.b32.xlu0 %v1354, 112
        %v1474 = vpop.permute.xlu0 %1473
        %v1477 = vsel %vm1355, %v1471, 0
        %1479 = vmatpush.bf16.msra.mxu0 0
        %1480 = vmatpush.bf16.msra.mxu0 0
        %1481 = vmatpush.bf16.msra.mxu0 0
        %1482 = vmatpush.bf16.msra.mxu0 0
        %1483 = vmatpush.bf16.msra.mxu0 0
        %1484 = vmatpush.bf16.msra.mxu0 0
        %1485 = vmatpush.bf16.msra.mxu0 0
        %1486 = vmatpush.bf16.msra.mxu0 %v1474
        %1487 = vmatmul.bf16.gmra.mxu0 %v1477
        %v1488 = vpop.f32.mrf.mxu0
        %v1489 = vadd.f32 0.0, %v1488
        %v1490 = vpop.f32.mrf.mxu0
        %v1491 = vadd.f32 0.0, %v1490
        %1492 = vdwg.mxu0
        %v1493 = vpack.c.bf16 %v1491, %v1489
        %v1496 = vunpack.c.l.b16 %v1350
        %v1497 = vunpack.c.l.b16 %v1351
        %v1498 = vpack.c.b16 %v1497, %v1496
        %v1501 = vsel %vm1355, %v1493, 0
        %1503 = vmatpush.bf16.msra.mxu0 0
        %1504 = vmatpush.bf16.msra.mxu0 0
        %1505 = vmatpush.bf16.msra.mxu0 0
        %1506 = vmatpush.bf16.msra.mxu0 0
        %1507 = vmatpush.bf16.msra.mxu0 0
        %1508 = vmatpush.bf16.msra.mxu0 0
        %1509 = vmatpush.bf16.msra.mxu0 0
        %1510 = vmatpush.bf16.msra.mxu0 %v1498
        %1511 = vmatmul.bf16.gmra.mxu0 %v1501
        %v1512 = vpop.f32.mrf.mxu0
        %v1513 = vadd.f32 0.0, %v1512
        %v1514 = vpop.f32.mrf.mxu0
        %v1515 = vadd.f32 0.0, %v1514
        %1516 = vdwg.mxu0
        %v1519 = vunpack.c.l.b16 %v1348
        %v1520 = vunpack.c.l.b16 %v1349
        %v1521 = vpack.c.b16 %v1520, %v1519
        %v1524 = vsel %vm1355, %v1420, 0
        %1526 = vmatpush.bf16.msra.mxu0 0
        %1527 = vmatpush.bf16.msra.mxu0 0
        %1528 = vmatpush.bf16.msra.mxu0 0
        %1529 = vmatpush.bf16.msra.mxu0 0
        %1530 = vmatpush.bf16.msra.mxu0 0
        %1531 = vmatpush.bf16.msra.mxu0 0
        %1532 = vmatpush.bf16.msra.mxu0 0
        %1533 = vmatpush.bf16.msra.mxu0 %v1521
        %1534 = vmatmul.bf16.gmra.mxu0 %v1524
        %v1535 = vpop.f32.mrf.mxu0
        %v1536 = vadd.f32 %v1513, %v1535
        %v1537 = vpop.f32.mrf.mxu0
        %v1538 = vadd.f32 %v1515, %v1537
        %1539 = vdwg.mxu0
        %v1540 = vld [vmem:[%s1059] sm:$0x1]
        %v1542 = vperm.slane %v1540, 0
        %v1544 = vadd.f32 %v1536, %v1542
        %v1545 = vadd.f32 %v1538, %v1542
        %v1546 = vadd.f32 %v1081, %v1544
        %v1547 = vadd.f32 %v1082, %v1545
        %v1548 = vld [vmem:[%s1062] sm:$0x1]
        %v1549 = vld [vmem:[%s880] sm:$0x1]
        %1550 = vadd.xlane.f32.xlu0 %v1546
        %v1551 = vpop.xlane.xlu0 %1550
        %1552 = vadd.xlane.f32.xlu0 %v1547
        %v1553 = vpop.xlane.xlu0 %1552
        %v1554 = vmul.f32 %v1551, 0.03125
        %v1555 = vmul.f32 %v1553, 0.03125
        %v1556 = vmul.f32 %v1546, %v1546
        %v1557 = vmul.f32 %v1547, %v1547
        %1558 = vadd.xlane.f32.xlu0 %v1556
        %v1559 = vpop.xlane.xlu0 %1558
        %1560 = vadd.xlane.f32.xlu0 %v1557
        %v1561 = vpop.xlane.xlu0 %1560
        %v1562 = vmul.f32 %v1559, 0.03125
        %v1563 = vmul.f32 %v1561, 0.03125
        %v1564 = vmul.f32 %v1554, %v1554
        %v1565 = vmul.f32 %v1555, %v1555
        %v1566 = vsub.f32 %v1562, %v1564
        %v1567 = vsub.f32 %v1563, %v1565
        %v1568 = vmax.f32 %v1566, 0.0
        %v1569 = vmax.f32 %v1567, 0.0
        %v1570 = vsub.f32 %v1546, %v1554
        %v1571 = vsub.f32 %v1547, %v1555
        %v1572 = vadd.f32 %v1568, 0.0001
        %v1573 = vadd.f32 %v1569, 0.0001
        %v1574 = vrsqrt.pop %v1572
        %v1575 = vmul.f32 %v1574, %v1572
        %v1576 = vmul.f32 %v1575, %v1574
        %v1577 = vmul.f32 0.5, %v1576
        %v1578 = vsub.f32 1.5, %v1577
        %v1579 = vmul.f32 %v1574, %v1578
        %vm1580 = vweird.f32 %v1572
        %vm1581 = vweird.f32 %v1574
        %vm1582 = vmor %vm1580, %vm1581
        %v1583 = vsel %vm1582, %v1574, %v1579
        %v1584 = vrsqrt.pop %v1573
        %v1585 = vmul.f32 %v1584, %v1573
        %v1586 = vmul.f32 %v1585, %v1584
        %v1587 = vmul.f32 0.5, %v1586
        %v1588 = vsub.f32 1.5, %v1587
        %v1589 = vmul.f32 %v1584, %v1588
        %vm1590 = vweird.f32 %v1573
        %vm1591 = vweird.f32 %v1584
        %vm1592 = vmor %vm1590, %vm1591
        %v1593 = vsel %vm1592, %v1584, %v1589
        %v1594 = vmul.f32 %v1570, %v1583
        %v1595 = vmul.f32 %v1571, %v1593
        %v1597 = vperm.slane %v1548, 0
        %v1599 = vmul.f32 %v1594, %v1597
        %v1600 = vmul.f32 %v1595, %v1597
        %v1602 = vperm.slane %v1549, 0
        %v1604 = vadd.f32 %v1599, %v1602
        %v1605 = vadd.f32 %v1600, %v1602
        %v1606 = vmul.f32 %v1604, %v1089
        %v1607 = vmul.f32 %v1605, %v1094
        %vm1610 = vcmask 1040384
        %v1611 = vrot.slane %v1606, 7
        %v1612 = vrot.slane %v1607, 7
        %v1613 = vsel %vm1610, %v1611, %v1612
        %v1617 = vsel %vm1610, 0.0, %v1611
        %v1618 = vsel %vm1610, %v1612, 0.0
        %vm1621 = vcmask 1046528
        %v1622 = vrot.slane %v1617, 1
        %v1623 = vrot.slane %v1613, 1
        %v1624 = vsel %vm1621, %v1622, %v1623
        %v1625 = vrot.slane %v1618, 1
        %v1626 = vsel %vm1621, %v1623, %v1625
        %vm1629 = vcmask 1045504
        %v1630 = vrot.slane %v1617, 2
        %v1631 = vrot.slane %v1613, 2
        %v1632 = vsel %vm1629, %v1630, %v1631
        %v1633 = vrot.slane %v1618, 2
        %v1634 = vsel %vm1629, %v1631, %v1633
        %v1637 = vpack.c.bf16 %v1613, %v1617
        %v1638 = vpack.c.bf16 %v1626, %v1624
        %v1639 = vpack.c.bf16 %v1634, %v1632
        %v1640 = vld [vmem:[%s890] sm:$0xf]
        %v1641 = vld [vmem:[%s890 + $0x4] sm:$0xf]
        %v1642 = vld [vmem:[%s890 + $0x8] sm:$0xf]
        %v1643 = vld [vmem:[%s890 + $0xc] sm:$0xf]
        %v1644 = vld [vmem:[%s890 + $0x10] sm:$0xf]
        %v1645 = vld [vmem:[%s890 + $0x14] sm:$0xf]
        %v1646 = vld [vmem:[%s890 + $0x18] sm:$0xf]
        %v1647 = vld [vmem:[%s890 + $0x1c] sm:$0xf]
        %v1648 = vld [vmem:[%s890 + $0x20] sm:$0xf]
        %v1649 = vld [vmem:[%s890 + $0x24] sm:$0xf]
        %v1650 = vld [vmem:[%s890 + $0x28] sm:$0xf]
        %v1651 = vld [vmem:[%s890 + $0x2c] sm:$0xf]
        %v1652 = vld [vmem:[%s890 + $0x30] sm:$0xf]
        %v1653 = vld [vmem:[%s890 + $0x34] sm:$0xf]
        %v1654 = vld [vmem:[%s890 + $0x38] sm:$0xf]
        %v1655 = vld [vmem:[%s890 + $0x3c] sm:$0xf]
        %v1656 = vld [vmem:[%s890 + $0x40] sm:$0xf]
        %v1657 = vld [vmem:[%s890 + $0x44] sm:$0xf]
        %v1658 = vld [vmem:[%s890 + $0x48] sm:$0xf]
        %v1659 = vld [vmem:[%s890 + $0x4c] sm:$0xf]
        %v1660 = vld [vmem:[%s890 + $0x50] sm:$0xf]
        %v1661 = vld [vmem:[%s890 + $0x54] sm:$0xf]
        %v1662 = vld [vmem:[%s890 + $0x58] sm:$0xf]
        %v1663 = vld [vmem:[%s890 + $0x5c] sm:$0xf]
        %v1664 = vld [vmem:[%s890 + $0x60] sm:$0xf]
        %v1665 = vld [vmem:[%s890 + $0x64] sm:$0xf]
        %v1666 = vld [vmem:[%s890 + $0x68] sm:$0xf]
        %v1667 = vld [vmem:[%s890 + $0x6c] sm:$0xf]
        %v1668 = vld [vmem:[%s890 + $0x70] sm:$0xf]
        %v1669 = vld [vmem:[%s890 + $0x74] sm:$0xf]
        %v1670 = vld [vmem:[%s890 + $0x78] sm:$0xf]
        %v1671 = vld [vmem:[%s890 + $0x7c] sm:$0xf]
        %v1672 = vld [vmem:[%s890 + $0x80] sm:$0xf]
        %v1673 = vld [vmem:[%s890 + $0x84] sm:$0xf]
        %v1674 = vld [vmem:[%s890 + $0x88] sm:$0xf]
        %v1675 = vld [vmem:[%s890 + $0x8c] sm:$0xf]
        %v1676 = vld [vmem:[%s890 + $0x90] sm:$0xf]
        %v1677 = vld [vmem:[%s890 + $0x94] sm:$0xf]
        %v1678 = vld [vmem:[%s890 + $0x98] sm:$0xf]
        %v1679 = vld [vmem:[%s890 + $0x9c] sm:$0xf]
        %v1680 = vld [vmem:[%s890 + $0xa0] sm:$0xf]
        %v1681 = vld [vmem:[%s890 + $0xa4] sm:$0xf]
        %v1682 = vld [vmem:[%s890 + $0xa8] sm:$0xf]
        %v1683 = vld [vmem:[%s890 + $0xac] sm:$0xf]
        %v1684 = vld [vmem:[%s890 + $0xb0] sm:$0xf]
        %v1685 = vld [vmem:[%s890 + $0xb4] sm:$0xf]
        %v1686 = vld [vmem:[%s890 + $0xb8] sm:$0xf]
        %v1687 = vld [vmem:[%s890 + $0xbc] sm:$0xf]
        %v1688 = vld [vmem:[%s1065] sm:$0x1]
        %v1690 = vperm.slane %v1688, 0
        %v1740 = vunpack.c.l.b16 %v1640
        %v1741 = vunpack.c.l.b16 %v1641
        %v1742 = vunpack.c.l.b16 %v1642
        %v1743 = vunpack.c.l.b16 %v1643
        %v1744 = vunpack.c.l.b16 %v1644
        %v1745 = vunpack.c.l.b16 %v1645
        %v1746 = vunpack.c.l.b16 %v1646
        %v1747 = vunpack.c.l.b16 %v1647
        %v1748 = vunpack.c.l.b16 %v1648
        %v1749 = vunpack.c.l.b16 %v1649
        %v1750 = vunpack.c.l.b16 %v1650
        %v1751 = vunpack.c.l.b16 %v1651
        %v1752 = vunpack.c.l.b16 %v1652
        %v1753 = vunpack.c.l.b16 %v1653
        %v1754 = vunpack.c.l.b16 %v1654
        %v1755 = vunpack.c.l.b16 %v1655
        %v1756 = vunpack.c.l.b16 %v1656
        %v1757 = vunpack.c.l.b16 %v1657
        %v1758 = vunpack.c.l.b16 %v1658
        %v1759 = vunpack.c.l.b16 %v1659
        %v1760 = vunpack.c.l.b16 %v1660
        %v1761 = vunpack.c.l.b16 %v1661
        %v1762 = vunpack.c.l.b16 %v1662
        %v1763 = vunpack.c.l.b16 %v1663
        %v1764 = vunpack.c.l.b16 %v1664
        %v1765 = vunpack.c.l.b16 %v1665
        %v1766 = vunpack.c.l.b16 %v1666
        %v1767 = vunpack.c.l.b16 %v1667
        %v1768 = vunpack.c.l.b16 %v1668
        %v1769 = vunpack.c.l.b16 %v1669
        %v1770 = vunpack.c.l.b16 %v1670
        %v1771 = vunpack.c.l.b16 %v1671
        %v1772 = vunpack.c.l.b16 %v1672
        %v1773 = vunpack.c.l.b16 %v1673
        %v1774 = vunpack.c.l.b16 %v1674
        %v1775 = vunpack.c.l.b16 %v1675
        %v1776 = vunpack.c.l.b16 %v1676
        %v1777 = vunpack.c.l.b16 %v1677
        %v1778 = vunpack.c.l.b16 %v1678
        %v1779 = vunpack.c.l.b16 %v1679
        %v1780 = vunpack.c.l.b16 %v1680
        %v1781 = vunpack.c.l.b16 %v1681
        %v1782 = vunpack.c.l.b16 %v1682
        %v1783 = vunpack.c.l.b16 %v1683
        %v1784 = vunpack.c.l.b16 %v1684
        %v1785 = vunpack.c.l.b16 %v1685
        %v1786 = vunpack.c.l.b16 %v1686
        %v1787 = vunpack.c.l.b16 %v1687
        %v1788 = vpack.c.b16 %v1741, %v1740
        %v1789 = vpack.c.b16 %v1743, %v1742
        %v1790 = vpack.c.b16 %v1745, %v1744
        %v1791 = vpack.c.b16 %v1747, %v1746
        %v1792 = vpack.c.b16 %v1749, %v1748
        %v1793 = vpack.c.b16 %v1751, %v1750
        %v1794 = vpack.c.b16 %v1753, %v1752
        %v1795 = vpack.c.b16 %v1755, %v1754
        %v1796 = vpack.c.b16 %v1757, %v1756
        %v1797 = vpack.c.b16 %v1759, %v1758
        %v1798 = vpack.c.b16 %v1761, %v1760
        %v1799 = vpack.c.b16 %v1763, %v1762
        %v1800 = vpack.c.b16 %v1765, %v1764
        %v1801 = vpack.c.b16 %v1767, %v1766
        %v1802 = vpack.c.b16 %v1769, %v1768
        %v1803 = vpack.c.b16 %v1771, %v1770
        %v1804 = vpack.c.b16 %v1773, %v1772
        %v1805 = vpack.c.b16 %v1775, %v1774
        %v1806 = vpack.c.b16 %v1777, %v1776
        %v1807 = vpack.c.b16 %v1779, %v1778
        %v1808 = vpack.c.b16 %v1781, %v1780
        %v1809 = vpack.c.b16 %v1783, %v1782
        %v1810 = vpack.c.b16 %v1785, %v1784
        %v1811 = vpack.c.b16 %v1787, %v1786
        %1836 = vmatpush.bf16.msra.mxu0 %v1795
        %1837 = vmatpush.bf16.msra.mxu0 %v1794
        %1838 = vmatpush.bf16.msra.mxu0 %v1793
        %1839 = vmatpush.bf16.msra.mxu0 %v1792
        %1840 = vmatpush.bf16.msra.mxu0 %v1791
        %1841 = vmatpush.bf16.msra.mxu0 %v1790
        %1842 = vmatpush.bf16.msra.mxu0 %v1789
        %1843 = vmatpush.bf16.msra.mxu0 %v1788
        %1844 = vmatmul.bf16.gmra.mxu0 %v1637
        %v1845 = vpop.f32.mrf.mxu0
        %v1846 = vadd.f32 %v1690, %v1845
        %v1847 = vpop.f32.mrf.mxu0
        %v1848 = vadd.f32 %v1690, %v1847
        %1849 = vdwg.mxu0
        %1850 = vmatpush.bf16.msra.mxu0 %v1803
        %1851 = vmatpush.bf16.msra.mxu0 %v1802
        %1852 = vmatpush.bf16.msra.mxu0 %v1801
        %1853 = vmatpush.bf16.msra.mxu0 %v1800
        %1854 = vmatpush.bf16.msra.mxu0 %v1799
        %1855 = vmatpush.bf16.msra.mxu0 %v1798
        %1856 = vmatpush.bf16.msra.mxu0 %v1797
        %1857 = vmatpush.bf16.msra.mxu0 %v1796
        %1858 = vmatmul.bf16.gmra.mxu0 %v1638
        %v1859 = vpop.f32.mrf.mxu0
        %v1860 = vadd.f32 %v1846, %v1859
        %v1861 = vpop.f32.mrf.mxu0
        %v1862 = vadd.f32 %v1848, %v1861
        %1863 = vdwg.mxu0
        %1864 = vmatpush.bf16.msra.mxu0 %v1811
        %1865 = vmatpush.bf16.msra.mxu0 %v1810
        %1866 = vmatpush.bf16.msra.mxu0 %v1809
        %1867 = vmatpush.bf16.msra.mxu0 %v1808
        %1868 = vmatpush.bf16.msra.mxu0 %v1807
        %1869 = vmatpush.bf16.msra.mxu0 %v1806
        %1870 = vmatpush.bf16.msra.mxu0 %v1805
        %1871 = vmatpush.bf16.msra.mxu0 %v1804
        %1872 = vmatmul.bf16.gmra.mxu0 %v1639
        %v1873 = vpop.f32.mrf.mxu0
        %v1874 = vadd.f32 %v1860, %v1873
        %v1875 = vpop.f32.mrf.mxu0
        %v1876 = vadd.f32 %v1862, %v1875
        %1877 = vdwg.mxu0
        %v1878 = vmax.f32 %v1874, 0.0
        %v1879 = vmax.f32 %v1876, 0.0
        %v1880 = vmul.f32 %v1878, %v1089
        %v1881 = vmul.f32 %v1879, %v1094
        %v1884 = vrot.slane %v1880, 7
        %v1885 = vrot.slane %v1881, 7
        %v1886 = vsel %vm1610, %v1884, %v1885
        %v1890 = vsel %vm1610, 0.0, %v1884
        %v1891 = vsel %vm1610, %v1885, 0.0
        %v1894 = vrot.slane %v1890, 1
        %v1895 = vrot.slane %v1886, 1
        %v1896 = vsel %vm1621, %v1894, %v1895
        %v1897 = vrot.slane %v1891, 1
        %v1898 = vsel %vm1621, %v1895, %v1897
        %v1901 = vrot.slane %v1890, 2
        %v1902 = vrot.slane %v1886, 2
        %v1903 = vsel %vm1629, %v1901, %v1902
        %v1904 = vrot.slane %v1891, 2
        %v1905 = vsel %vm1629, %v1902, %v1904
        %v1908 = vpack.c.bf16 %v1886, %v1890
        %v1909 = vpack.c.bf16 %v1898, %v1896
        %v1910 = vpack.c.bf16 %v1905, %v1903
        %v1911 = vld [vmem:[%s900] sm:$0xf]
        %v1912 = vld [vmem:[%s900 + $0x4] sm:$0xf]
        %v1913 = vld [vmem:[%s900 + $0x8] sm:$0xf]
        %v1914 = vld [vmem:[%s900 + $0xc] sm:$0xf]
        %v1915 = vld [vmem:[%s900 + $0x10] sm:$0xf]
        %v1916 = vld [vmem:[%s900 + $0x14] sm:$0xf]
        %v1917 = vld [vmem:[%s900 + $0x18] sm:$0xf]
        %v1918 = vld [vmem:[%s900 + $0x1c] sm:$0xf]
        %v1919 = vld [vmem:[%s900 + $0x20] sm:$0xf]
        %v1920 = vld [vmem:[%s900 + $0x24] sm:$0xf]
        %v1921 = vld [vmem:[%s900 + $0x28] sm:$0xf]
        %v1922 = vld [vmem:[%s900 + $0x2c] sm:$0xf]
        %v1923 = vld [vmem:[%s900 + $0x30] sm:$0xf]
        %v1924 = vld [vmem:[%s900 + $0x34] sm:$0xf]
        %v1925 = vld [vmem:[%s900 + $0x38] sm:$0xf]
        %v1926 = vld [vmem:[%s900 + $0x3c] sm:$0xf]
        %v1927 = vld [vmem:[%s900 + $0x40] sm:$0xf]
        %v1928 = vld [vmem:[%s900 + $0x44] sm:$0xf]
        %v1929 = vld [vmem:[%s900 + $0x48] sm:$0xf]
        %v1930 = vld [vmem:[%s900 + $0x4c] sm:$0xf]
        %v1931 = vld [vmem:[%s900 + $0x50] sm:$0xf]
        %v1932 = vld [vmem:[%s900 + $0x54] sm:$0xf]
        %v1933 = vld [vmem:[%s900 + $0x58] sm:$0xf]
        %v1934 = vld [vmem:[%s900 + $0x5c] sm:$0xf]
        %v1935 = vld [vmem:[%s900 + $0x60] sm:$0xf]
        %v1936 = vld [vmem:[%s900 + $0x64] sm:$0xf]
        %v1937 = vld [vmem:[%s900 + $0x68] sm:$0xf]
        %v1938 = vld [vmem:[%s900 + $0x6c] sm:$0xf]
        %v1939 = vld [vmem:[%s900 + $0x70] sm:$0xf]
        %v1940 = vld [vmem:[%s900 + $0x74] sm:$0xf]
        %v1941 = vld [vmem:[%s900 + $0x78] sm:$0xf]
        %v1942 = vld [vmem:[%s900 + $0x7c] sm:$0xf]
        %v1943 = vld [vmem:[%s900 + $0x80] sm:$0xf]
        %v1944 = vld [vmem:[%s900 + $0x84] sm:$0xf]
        %v1945 = vld [vmem:[%s900 + $0x88] sm:$0xf]
        %v1946 = vld [vmem:[%s900 + $0x8c] sm:$0xf]
        %v1947 = vld [vmem:[%s900 + $0x90] sm:$0xf]
        %v1948 = vld [vmem:[%s900 + $0x94] sm:$0xf]
        %v1949 = vld [vmem:[%s900 + $0x98] sm:$0xf]
        %v1950 = vld [vmem:[%s900 + $0x9c] sm:$0xf]
        %v1951 = vld [vmem:[%s900 + $0xa0] sm:$0xf]
        %v1952 = vld [vmem:[%s900 + $0xa4] sm:$0xf]
        %v1953 = vld [vmem:[%s900 + $0xa8] sm:$0xf]
        %v1954 = vld [vmem:[%s900 + $0xac] sm:$0xf]
        %v1955 = vld [vmem:[%s900 + $0xb0] sm:$0xf]
        %v1956 = vld [vmem:[%s900 + $0xb4] sm:$0xf]
        %v1957 = vld [vmem:[%s900 + $0xb8] sm:$0xf]
        %v1958 = vld [vmem:[%s900 + $0xbc] sm:$0xf]
        %v1959 = vld [vmem:[%s1068] sm:$0x1]
        %v1961 = vperm.slane %v1959, 0
        %v2011 = vunpack.c.l.b16 %v1911
        %v2012 = vunpack.c.l.b16 %v1912
        %v2013 = vunpack.c.l.b16 %v1913
        %v2014 = vunpack.c.l.b16 %v1914
        %v2015 = vunpack.c.l.b16 %v1915
        %v2016 = vunpack.c.l.b16 %v1916
        %v2017 = vunpack.c.l.b16 %v1917
        %v2018 = vunpack.c.l.b16 %v1918
        %v2019 = vunpack.c.l.b16 %v1919
        %v2020 = vunpack.c.l.b16 %v1920
        %v2021 = vunpack.c.l.b16 %v1921
        %v2022 = vunpack.c.l.b16 %v1922
        %v2023 = vunpack.c.l.b16 %v1923
        %v2024 = vunpack.c.l.b16 %v1924
        %v2025 = vunpack.c.l.b16 %v1925
        %v2026 = vunpack.c.l.b16 %v1926
        %v2027 = vunpack.c.l.b16 %v1927
        %v2028 = vunpack.c.l.b16 %v1928
        %v2029 = vunpack.c.l.b16 %v1929
        %v2030 = vunpack.c.l.b16 %v1930
        %v2031 = vunpack.c.l.b16 %v1931
        %v2032 = vunpack.c.l.b16 %v1932
        %v2033 = vunpack.c.l.b16 %v1933
        %v2034 = vunpack.c.l.b16 %v1934
        %v2035 = vunpack.c.l.b16 %v1935
        %v2036 = vunpack.c.l.b16 %v1936
        %v2037 = vunpack.c.l.b16 %v1937
        %v2038 = vunpack.c.l.b16 %v1938
        %v2039 = vunpack.c.l.b16 %v1939
        %v2040 = vunpack.c.l.b16 %v1940
        %v2041 = vunpack.c.l.b16 %v1941
        %v2042 = vunpack.c.l.b16 %v1942
        %v2043 = vunpack.c.l.b16 %v1943
        %v2044 = vunpack.c.l.b16 %v1944
        %v2045 = vunpack.c.l.b16 %v1945
        %v2046 = vunpack.c.l.b16 %v1946
        %v2047 = vunpack.c.l.b16 %v1947
        %v2048 = vunpack.c.l.b16 %v1948
        %v2049 = vunpack.c.l.b16 %v1949
        %v2050 = vunpack.c.l.b16 %v1950
        %v2051 = vunpack.c.l.b16 %v1951
        %v2052 = vunpack.c.l.b16 %v1952
        %v2053 = vunpack.c.l.b16 %v1953
        %v2054 = vunpack.c.l.b16 %v1954
        %v2055 = vunpack.c.l.b16 %v1955
        %v2056 = vunpack.c.l.b16 %v1956
        %v2057 = vunpack.c.l.b16 %v1957
        %v2058 = vunpack.c.l.b16 %v1958
        %v2059 = vpack.c.b16 %v2012, %v2011
        %v2060 = vpack.c.b16 %v2014, %v2013
        %v2061 = vpack.c.b16 %v2016, %v2015
        %v2062 = vpack.c.b16 %v2018, %v2017
        %v2063 = vpack.c.b16 %v2020, %v2019
        %v2064 = vpack.c.b16 %v2022, %v2021
        %v2065 = vpack.c.b16 %v2024, %v2023
        %v2066 = vpack.c.b16 %v2026, %v2025
        %v2067 = vpack.c.b16 %v2028, %v2027
        %v2068 = vpack.c.b16 %v2030, %v2029
        %v2069 = vpack.c.b16 %v2032, %v2031
        %v2070 = vpack.c.b16 %v2034, %v2033
        %v2071 = vpack.c.b16 %v2036, %v2035
        %v2072 = vpack.c.b16 %v2038, %v2037
        %v2073 = vpack.c.b16 %v2040, %v2039
        %v2074 = vpack.c.b16 %v2042, %v2041
        %v2075 = vpack.c.b16 %v2044, %v2043
        %v2076 = vpack.c.b16 %v2046, %v2045
        %v2077 = vpack.c.b16 %v2048, %v2047
        %v2078 = vpack.c.b16 %v2050, %v2049
        %v2079 = vpack.c.b16 %v2052, %v2051
        %v2080 = vpack.c.b16 %v2054, %v2053
        %v2081 = vpack.c.b16 %v2056, %v2055
        %v2082 = vpack.c.b16 %v2058, %v2057
        %2107 = vmatpush.bf16.msra.mxu0 %v2066
        %2108 = vmatpush.bf16.msra.mxu0 %v2065
        %2109 = vmatpush.bf16.msra.mxu0 %v2064
        %2110 = vmatpush.bf16.msra.mxu0 %v2063
        %2111 = vmatpush.bf16.msra.mxu0 %v2062
        %2112 = vmatpush.bf16.msra.mxu0 %v2061
        %2113 = vmatpush.bf16.msra.mxu0 %v2060
        %2114 = vmatpush.bf16.msra.mxu0 %v2059
        %2115 = vmatmul.bf16.gmra.mxu0 %v1908
        %v2116 = vpop.f32.mrf.mxu0
        %v2117 = vadd.f32 %v1961, %v2116
        %v2118 = vpop.f32.mrf.mxu0
        %v2119 = vadd.f32 %v1961, %v2118
        %2120 = vdwg.mxu0
        %2121 = vmatpush.bf16.msra.mxu0 %v2074
        %2122 = vmatpush.bf16.msra.mxu0 %v2073
        %2123 = vmatpush.bf16.msra.mxu0 %v2072
        %2124 = vmatpush.bf16.msra.mxu0 %v2071
        %2125 = vmatpush.bf16.msra.mxu0 %v2070
        %2126 = vmatpush.bf16.msra.mxu0 %v2069
        %2127 = vmatpush.bf16.msra.mxu0 %v2068
        %2128 = vmatpush.bf16.msra.mxu0 %v2067
        %2129 = vmatmul.bf16.gmra.mxu0 %v1909
        %v2130 = vpop.f32.mrf.mxu0
        %v2131 = vadd.f32 %v2117, %v2130
        %v2132 = vpop.f32.mrf.mxu0
        %v2133 = vadd.f32 %v2119, %v2132
        %2134 = vdwg.mxu0
        %2135 = vmatpush.bf16.msra.mxu0 %v2082
        %2136 = vmatpush.bf16.msra.mxu0 %v2081
        %2137 = vmatpush.bf16.msra.mxu0 %v2080
        %2138 = vmatpush.bf16.msra.mxu0 %v2079
        %2139 = vmatpush.bf16.msra.mxu0 %v2078
        %2140 = vmatpush.bf16.msra.mxu0 %v2077
        %2141 = vmatpush.bf16.msra.mxu0 %v2076
        %2142 = vmatpush.bf16.msra.mxu0 %v2075
        %2143 = vmatmul.bf16.gmra.mxu0 %v1910
        %v2144 = vpop.f32.mrf.mxu0
        %v2145 = vadd.f32 %v2131, %v2144
        %v2146 = vpop.f32.mrf.mxu0
        %v2147 = vadd.f32 %v2133, %v2146
        %2148 = vdwg.mxu0
        %v2149 = vmul.f32 %v2145, %v1089
        %v2150 = vmul.f32 %v2147, %v1094
        %v2151 = vadd.f32 %v1604, %v2149
        %v2152 = vadd.f32 %v1605, %v2150
        %v2153 = vld [vmem:[%s1071] sm:$0x1]
        %v2154 = vld [vmem:[%s909] sm:$0x1]
        %2155 = vadd.xlane.f32.xlu0 %v2151
        %v2156 = vpop.xlane.xlu0 %2155
        %2157 = vadd.xlane.f32.xlu0 %v2152
        %v2158 = vpop.xlane.xlu0 %2157
        %v2159 = vmul.f32 %v2156, 0.03125
        %v2160 = vmul.f32 %v2158, 0.03125
        %v2161 = vmul.f32 %v2151, %v2151
        %v2162 = vmul.f32 %v2152, %v2152
        %2163 = vadd.xlane.f32.xlu0 %v2161
        %v2164 = vpop.xlane.xlu0 %2163
        %2165 = vadd.xlane.f32.xlu0 %v2162
        %v2166 = vpop.xlane.xlu0 %2165
        %v2167 = vmul.f32 %v2164, 0.03125
        %v2168 = vmul.f32 %v2166, 0.03125
        %v2169 = vmul.f32 %v2159, %v2159
        %v2170 = vmul.f32 %v2160, %v2160
        %v2171 = vsub.f32 %v2167, %v2169
        %v2172 = vsub.f32 %v2168, %v2170
        %v2173 = vmax.f32 %v2171, 0.0
        %v2174 = vmax.f32 %v2172, 0.0
        %v2175 = vsub.f32 %v2151, %v2159
        %v2176 = vsub.f32 %v2152, %v2160
        %v2177 = vadd.f32 %v2173, 0.0001
        %v2178 = vadd.f32 %v2174, 0.0001
        %v2179 = vrsqrt.pop %v2177
        %v2180 = vmul.f32 %v2179, %v2177
        %v2181 = vmul.f32 %v2180, %v2179
        %v2182 = vmul.f32 0.5, %v2181
        %v2183 = vsub.f32 1.5, %v2182
        %v2184 = vmul.f32 %v2179, %v2183
        %vm2185 = vweird.f32 %v2177
        %vm2186 = vweird.f32 %v2179
        %vm2187 = vmor %vm2185, %vm2186
        %v2188 = vsel %vm2187, %v2179, %v2184
        %v2189 = vrsqrt.pop %v2178
        %v2190 = vmul.f32 %v2189, %v2178
        %v2191 = vmul.f32 %v2190, %v2189
        %v2192 = vmul.f32 0.5, %v2191
        %v2193 = vsub.f32 1.5, %v2192
        %v2194 = vmul.f32 %v2189, %v2193
        %vm2195 = vweird.f32 %v2178
        %vm2196 = vweird.f32 %v2189
        %vm2197 = vmor %vm2195, %vm2196
        %v2198 = vsel %vm2197, %v2189, %v2194
        %v2199 = vmul.f32 %v2175, %v2188
        %v2200 = vmul.f32 %v2176, %v2198
        %v2202 = vperm.slane %v2153, 0
        %v2204 = vmul.f32 %v2199, %v2202
        %v2205 = vmul.f32 %v2200, %v2202
        %v2207 = vperm.slane %v2154, 0
        %v2209 = vadd.f32 %v2204, %v2207
        %v2210 = vadd.f32 %v2205, %v2207
        %2211 = vst [vmem:[#allocation2] sm:$0xff] %v2209
        %2212 = vst [vmem:[#allocation2 + $0x8] sm:$0xff] %v2210
        %p2213 = scmp.eq.s32.totalorder %s53, 1
        // Predicated region
        $region133: #{tpu_custom_call.1} parent=95 // pred_check
          %p2214 = pneg %p2213
        $region134: #{tpu_custom_call.1} parent=95 // pred_check_branch
          %2216 = sbr.rel (%p2214) target = $region136
        $region135: #{tpu_custom_call.1} parent=95 // pred_region
          %v2217 = vmul.f32 %v2209, %v1089
          %v2218 = vmul.f32 %v2210, %v1094
          %2219 = vst [vmem:[%s1034] sm:$0xff] %v2217
          %2220 = vst [vmem:[%s1034 + $0x8] sm:$0xff] %v2218
        $region136: #{tpu_custom_call.1} parent=95 // pred_fallthru
          _
        %s2221 = sand.u32 %s562, 1
        %s2222 = scalar_lea.sflag [#allocation5], %s2221
        %s2223 = sand.u32 %s562, 1
        %s2224 = smul.addr %s2223, 16
        %s2225 = scalar_lea.vmem [#allocation17], %s2224
        // Predicated region
        $region137: #{tpu_custom_call.1} parent=95 // pred_check
          %p2226 = pneg %p572
        $region138: #{tpu_custom_call.1} parent=95 // pred_check_branch
          %2228 = sbr.rel (%p2226) target = $region140
        $region139: #{tpu_custom_call.1} parent=95 // pred_region
          %2230 = vsyncadd %s2222, 0
          %s2231 = smul.addr %s52, 2
          %s2232 = smul.addr %s2231, 8
          %s2233 = scalar_lea.hbm %s19, %s2232
          %s2234 = sshll.u32 %s2225, 4
          %s2235 = int_to_ptr.vmem [resolvable:$true] %s2234
          %s2236 = sshll.u32 %s2233, 4
          %s2237 = int_to_ptr.hbm [resolvable:$true] %s2236
          %2242 = dma.vmem_to_hbm [thread:$0]  %s2235, 256, %s2237, %s2222, 128, 128, 8
        $region140: #{tpu_custom_call.1} parent=95 // pred_fallthru
          _
      $region96: #{tpu_custom_call.1} parent=5 // pred_fallthru
        _
      %p2243 = scmp.le.s32.totalorder 2, %s43
      // Predicated region
      $region141: #{tpu_custom_call.1} parent=5 // pred_check
        %p2244 = pneg %p2243
      $region142: #{tpu_custom_call.1} parent=5 // pred_check_branch
        %2246 = sbr.rel (%p2244) target = $region144
      $region143: #{tpu_custom_call.1} parent=5 // pred_region
        %s2247 = ssub.s32 %s43, 2
        // Predicated region
        $region145: #{tpu_custom_call.1} parent=143 // pred_check
          %p2248 = pneg %p578
        $region146: #{tpu_custom_call.1} parent=143 // pred_check_branch
          %2250 = sbr.rel (%p2248) target = $region148
        $region147: #{tpu_custom_call.1} parent=143 // pred_region
          %s2251 = sand.u32 %s563, 1
          %s2252 = scalar_lea.sflag [#allocation5], %s2251
          %s2253 = sand.u32 %s563, 1
          %s2254 = smul.addr %s2253, 16
          %s2255 = scalar_lea.vmem [#allocation17], %s2254
          %2257 = dma.done %s2252, 256
        $region148: #{tpu_custom_call.1} parent=143 // pred_fallthru
          _
      $region144: #{tpu_custom_call.1} parent=5 // pred_fallthru
        _
    $region6: #{tpu_custom_call.1} parent=1 // loop_footer
      %s47 = sadd.s32 1, %s43
    $region7: #{tpu_custom_call.1} parent=1 // loop_footer_branch
      %42 = sbr.rel target = $region3
    $region8: #{tpu_custom_call.1} parent=1 // loop_exit
      _
    %2258 = vsyncpa [#allocation4], 1
    %s2259 = scalar_lea.sflag [#allocation4], 1
    %2260 = vsyncpa %s2259, 1
    %2261 = vsyncpa [#allocation7], 1
    %s2262 = scalar_lea.sflag [#allocation7], 1
    %2263 = vsyncpa %s2262, 1
    %2264 = vsyncpa [#allocation10], 1
    %s2265 = scalar_lea.sflag [#allocation10], 1
    %2266 = vsyncpa %s2265, 1
    %2267 = vsyncpa [#allocation13], 1
    %s2268 = scalar_lea.sflag [#allocation13], 1
    %2269 = vsyncpa %s2268, 1
    %2270 = vsyncpa [#allocation16], 1
    %s2271 = scalar_lea.sflag [#allocation16], 1
    %2272 = vsyncpa %s2271, 1
    %2273 = vsyncpa [#allocation5], 1
    %s2274 = scalar_lea.sflag [#allocation5], 1
    %2275 = vsyncpa %s2274, 1

</llo_original>
